<compile_context>
chip_gen: v5e
topology: v5e:2x2
jax: 0.10.0
libtpu: 0.0.40
codegen_flags: <defaults>
</compile_context>

<pallas_src>
import jax
import jax.numpy as jnp
from jax.experimental import pallas as pl
from jax.experimental.pallas import tpu as pltpu

K_IN = 784           # 28 * 28 (full last dim of x -- no HBM-side K padding)
N_HID = 512
N_OUT = 10
N_OUT_PAD = 128      # lane-dense output width; wrapper slices [:, :10]


def _round_up(x, m):
    return (x + m - 1) // m * m


def _cdiv(a, b):
    return -(-a // b)


def fcmnist_kernel(x_ref, w1_ref, b1_ref, w2_ref, b2_ref, o_ref):
    """Fused MLP forward for one batch tile: relu(x @ W1 + b1) @ W2 + b2."""
    x = x_ref[...].astype(jnp.bfloat16)          # in-kernel f32->bf16 cast (VPU, hidden under MXU)
    # fc1: (TB, 784) bf16 @ (784, 512) bf16 -> f32 on the MXU.
    h = jnp.dot(x, w1_ref[...], preferred_element_type=jnp.float32)
    h = jnp.maximum(h + b1_ref[...], 0.0)        # bias + ReLU in f32 (VPU)
    # fc2: (TB, 512) bf16 @ (512, 128) bf16 -> f32 on the MXU.
    y = jnp.dot(h.astype(jnp.bfloat16), w2_ref[...],
                preferred_element_type=jnp.float32)
    o_ref[...] = (y + b2_ref[...]).astype(o_ref.dtype)


def prepare_params(w1, b1, w2, b2):
    """One-time parameter prep (hoisted out of the per-call hot path).

    w1: (784, 512), b1: (1, 512), w2: (512, 10), b2: (1, 10) -- PyTorch Linear
    weights transposed to (in, out) layout.  Returns bf16 weights and the
    10->128 zero-padded fc2 weight/bias (padded lanes are sliced off later, so
    the math is exact).
    """
    w1_p = w1.astype(jnp.bfloat16)                                       # (784, 512) bf16
    b1_p = b1.astype(jnp.float32).reshape(1, N_HID)                      # (1, 512)  f32
    w2_p = jnp.pad(w2.astype(jnp.float32),
                   ((0, 0), (0, N_OUT_PAD - N_OUT))).astype(jnp.bfloat16)  # (512, 128) bf16
    b2_p = jnp.pad(b2.astype(jnp.float32).reshape(1, N_OUT),
                   ((0, 0), (0, N_OUT_PAD - N_OUT)))                     # (1, 128)  f32
    return w1_p, b1_p, w2_p, b2_p


def fcmnist_forward(x, w1_p, b1_p, w2_p, b2_p, *, tb=2048):
    """x: (B, 1, 28, 28) or (B, 784) float32.  Returns (B, 10) f32 logits."""
    x_flat = x.reshape(-1, K_IN).astype(jnp.float32)
    B = x_flat.shape[0]

    # Batch tile: multiple of 16 sublanes, capped at `tb`.  Small batches use a
    # single full-extent block (any B is a legal full-dim block).  If one tile
    # would cover a reasonably large batch, split it in two so the "parallel"
    # grid axis can shard across v7x's two TensorCores.
    TB = min(tb, _round_up(B, 16))
    if TB > B:
        TB = B                                   # full-extent block
    if _cdiv(B, TB) < 2 and B >= 64:
        TB = _round_up(_cdiv(B, 2), 16)          # guarantee >= 2 grid steps
    grid = (_cdiv(B, TB),)

    resident = pl.Buffered(1)                    # grid-invariant: single-buffered

    cost = pl.CostEstimate(
        flops=2 * B * (K_IN * N_HID + N_HID * N_OUT_PAD),
        transcendentals=0,
        bytes_accessed=(B * K_IN * 4               # x streamed in (f32)
                        + K_IN * N_HID * 2         # W1 (bf16)
                        + N_HID * N_OUT_PAD * 2    # W2 (bf16)
                        + (N_HID + N_OUT_PAD) * 4  # biases (f32)
                        + B * N_OUT_PAD * 4),      # logits out (f32)
    )

    out = pl.pallas_call(
        fcmnist_kernel,
        out_shape=jax.ShapeDtypeStruct((B, N_OUT_PAD), jnp.float32),
        grid=grid,
        in_specs=[
            pl.BlockSpec((TB, K_IN), lambda i: (i, 0)),              # x tiles stream
            pl.BlockSpec((K_IN, N_HID), lambda i: (0, 0),
                         pipeline_mode=resident),                    # W1 resident
            pl.BlockSpec((1, N_HID), lambda i: (0, 0),
                         pipeline_mode=resident),                    # b1 resident
            pl.BlockSpec((N_HID, N_OUT_PAD), lambda i: (0, 0),
                         pipeline_mode=resident),                    # W2 resident
            pl.BlockSpec((1, N_OUT_PAD), lambda i: (0, 0),
                         pipeline_mode=resident),                    # b2 resident
        ],
        out_specs=pl.BlockSpec((TB, N_OUT_PAD), lambda i: (i, 0)),
        compiler_params=pltpu.CompilerParams(
            dimension_semantics=("parallel",),   # batch tiles shard across TCs
            vmem_limit_bytes=40 * 1024 * 1024,   # ~16 MiB used at TB=2048; headroom on v7x (64 MiB)
        ),
        cost_estimate=cost,
    )(x_flat, w1_p, b1_p, w2_p, b2_p)

    return out[:, :N_OUT]


def init_params(key):
    """Mirror nn.Linear's default U(-1/sqrt(fan_in), +1/sqrt(fan_in)) init.

    Weights are built directly in (in_features, out_features) layout, i.e. the
    transpose of PyTorch's (out, in) storage, so the kernel computes x @ W.
    """
    k1, k2, k3, k4 = jax.random.split(key, 4)
    lim1 = 1.0 / jnp.sqrt(784.0)
    lim2 = 1.0 / jnp.sqrt(512.0)
    w1 = jax.random.uniform(k1, (K_IN, N_HID), jnp.float32, -lim1, lim1)
    b1 = jax.random.uniform(k2, (1, N_HID), jnp.float32, -lim1, lim1)
    w2 = jax.random.uniform(k3, (N_HID, N_OUT), jnp.float32, -lim2, lim2)
    b2 = jax.random.uniform(k4, (1, N_OUT), jnp.float32, -lim2, lim2)
    return w1, b1, w2, b2


if __name__ == "__main__":
    key = jax.random.PRNGKey(0)
    k_params, k_x1, k_x2 = jax.random.split(key, 3)

    w1, b1, w2, b2 = init_params(k_params)
    params = prepare_params(w1, b1, w2, b2)   # one-time prep, outside the hot path

    def reference(x_flat):
        # Pure-JAX reference mirroring the kernel's bf16 MXU datapath (f32 accumulate).
        x_bf = x_flat.astype(jnp.bfloat16).astype(jnp.float32)
        w1_bf = w1.astype(jnp.bfloat16).astype(jnp.float32)
        w2_bf = w2.astype(jnp.bfloat16).astype(jnp.float32)
        h = jnp.maximum(x_bf @ w1_bf + b1, 0.0)
        return h.astype(jnp.bfloat16).astype(jnp.float32) @ w2_bf + b2

    # Test 1: small MNIST-shaped batch (B, C, H, W) = (2, 1, 28, 28), NCHW like PyTorch.
    x1 = jax.random.normal(k_x1, (2, 1, 28, 28), jnp.float32)
    logits1 = jax.block_until_ready(fcmnist_forward(x1, *params))
    ref1 = reference(x1.reshape(-1, K_IN))
    assert logits1.shape == (2, 10)
    assert jnp.allclose(logits1, ref1, atol=2e-2, rtol=2e-2), (
        float(jnp.max(jnp.abs(logits1 - ref1))))

    # Test 2: ragged batch (B=70, tb=16 -> 5 grid steps, partial last tile)
    # exercises the masked edge-block store with no batch padding.
    x2 = jax.random.normal(k_x2, (70, 1, 28, 28), jnp.float32)
    logits2 = jax.block_until_ready(fcmnist_forward(x2, *params, tb=16))
    ref2 = reference(x2.reshape(-1, K_IN))
    assert logits2.shape == (70, 10)
    assert jnp.allclose(logits2, ref2, atol=2e-2, rtol=2e-2), (
        float(jnp.max(jnp.abs(logits2 - ref2))))

    print("KERNEL_OK")
</pallas_src>

<mosaic_0001>
module attributes {stable_mosaic.version = 11 : i64} {
  func.func @fcmnist_kernel(%arg0: i32, %arg1: memref<2x784xf32, #tpu.memory_space<vmem>>, %arg2: memref<784x512xbf16, #tpu.memory_space<vmem>>, %arg3: memref<1x512xf32, #tpu.memory_space<vmem>>, %arg4: memref<512x128xbf16, #tpu.memory_space<vmem>>, %arg5: memref<1x128xf32, #tpu.memory_space<vmem>>, %arg6: memref<2x128xf32, #tpu.memory_space<vmem>>) attributes {dimension_semantics = [#tpu.dimension_semantics<parallel>], iteration_bounds = array<i64: 1>, scalar_prefetch = 0 : i64, scratch_operands = 0 : i64, tpu.core_type = #tpu.core_type<tc>, window_params = [{transform_indices = @transform_0, window_bounds = array<i64: 2, 784>}, {pipeline_mode = #tpu.pipeline_mode<synchronous>, transform_indices = @transform_1, window_bounds = array<i64: 784, 512>}, {pipeline_mode = #tpu.pipeline_mode<synchronous>, transform_indices = @transform_2, window_bounds = array<i64: 1, 512>}, {pipeline_mode = #tpu.pipeline_mode<synchronous>, transform_indices = @transform_3, window_bounds = array<i64: 512, 128>}, {pipeline_mode = #tpu.pipeline_mode<synchronous>, transform_indices = @transform_4, window_bounds = array<i64: 1, 128>}, {transform_indices = @transform_5, window_bounds = array<i64: 2, 128>}]} {
    %c0 = arith.constant 0 : index
    %c0_0 = arith.constant 0 : index
    %0 = vector.load %arg1[%c0, %c0_0] : memref<2x784xf32, #tpu.memory_space<vmem>>, vector<2x784xf32>
    %1 = arith.truncf %0 : vector<2x784xf32> to vector<2x784xbf16>
    %c0_1 = arith.constant 0 : index
    %c0_2 = arith.constant 0 : index
    %2 = vector.load %arg2[%c0_1, %c0_2] : memref<784x512xbf16, #tpu.memory_space<vmem>>, vector<784x512xbf16>
    %cst = arith.constant dense<0.000000e+00> : vector<2x512xf32>
    %3 = tpu.matmul %1, %2, %cst {dimension_numbers = #tpu.dot_dimension_numbers<[1], [0], [0], [1], [0, 0, 1, 1], [], []>} : vector<2x784xbf16>, vector<784x512xbf16>, vector<2x512xf32> -> vector<2x512xf32>
    %c0_3 = arith.constant 0 : index
    %c0_4 = arith.constant 0 : index
    %4 = vector.load %arg3[%c0_3, %c0_4] : memref<1x512xf32, #tpu.memory_space<vmem>>, vector<1x512xf32>
    %5 = vector.broadcast %4 : vector<1x512xf32> to vector<2x512xf32>
    %6 = arith.addf %3, %5 : vector<2x512xf32>
    %cst_5 = arith.constant 0.000000e+00 : f32
    %7 = vector.broadcast %cst_5 : f32 to vector<2x512xf32>
    %8 = arith.maximumf %6, %7 : vector<2x512xf32>
    %9 = arith.truncf %8 : vector<2x512xf32> to vector<2x512xbf16>
    %c0_6 = arith.constant 0 : index
    %c0_7 = arith.constant 0 : index
    %10 = vector.load %arg4[%c0_6, %c0_7] : memref<512x128xbf16, #tpu.memory_space<vmem>>, vector<512x128xbf16>
    %cst_8 = arith.constant dense<0.000000e+00> : vector<2x128xf32>
    %11 = tpu.matmul %9, %10, %cst_8 {dimension_numbers = #tpu.dot_dimension_numbers<[1], [0], [0], [1], [0, 0, 1, 1], [], []>} : vector<2x512xbf16>, vector<512x128xbf16>, vector<2x128xf32> -> vector<2x128xf32>
    %c0_9 = arith.constant 0 : index
    %c0_10 = arith.constant 0 : index
    %12 = vector.load %arg5[%c0_9, %c0_10] : memref<1x128xf32, #tpu.memory_space<vmem>>, vector<1x128xf32>
    %13 = vector.broadcast %12 : vector<1x128xf32> to vector<2x128xf32>
    %14 = arith.addf %11, %13 : vector<2x128xf32>
    %c0_11 = arith.constant 0 : index
    %c0_12 = arith.constant 0 : index
    %15 = vector.load %arg6[%c0_11, %c0_12] : memref<2x128xf32, #tpu.memory_space<vmem>>, vector<2x128xf32>
    tpu.vector_store %arg6[%c0_11, %c0_12], %14 {strides = array<i32>} : memref<2x128xf32, #tpu.memory_space<vmem>>, vector<2x128xf32>,
    return
  }
  func.func @transform_0(%arg0: i32) -> (i32, i32) {
    %c0_i32 = arith.constant 0 : i32
    %c0_i32_0 = arith.constant 0 : i32
    return %arg0, %c0_i32 : i32, i32
  }
  func.func @transform_1(%arg0: i32) -> (i32, i32) {
    %c0_i32 = arith.constant 0 : i32
    %c0_i32_0 = arith.constant 0 : i32
    %c0_i32_1 = arith.constant 0 : i32
    return %c0_i32, %c0_i32_0 : i32, i32
  }
  func.func @transform_2(%arg0: i32) -> (i32, i32) {
    %c0_i32 = arith.constant 0 : i32
    %c0_i32_0 = arith.constant 0 : i32
    %c0_i32_1 = arith.constant 0 : i32
    return %c0_i32, %c0_i32_0 : i32, i32
  }
  func.func @transform_3(%arg0: i32) -> (i32, i32) {
    %c0_i32 = arith.constant 0 : i32
    %c0_i32_0 = arith.constant 0 : i32
    %c0_i32_1 = arith.constant 0 : i32
    return %c0_i32, %c0_i32_0 : i32, i32
  }
  func.func @transform_4(%arg0: i32) -> (i32, i32) {
    %c0_i32 = arith.constant 0 : i32
    %c0_i32_0 = arith.constant 0 : i32
    %c0_i32_1 = arith.constant 0 : i32
    return %c0_i32, %c0_i32_0 : i32, i32
  }
  func.func @transform_5(%arg0: i32) -> (i32, i32) {
    %c0_i32 = arith.constant 0 : i32
    %c0_i32_0 = arith.constant 0 : i32
    return %arg0, %c0_i32 : i32, i32
  }
}

</mosaic_0001>

<llo_original>
// kernel: tpu_custom_call.1
$region0: #{tpu_custom_call.1}
  #allocation0 [shape = 'u32[]', space=smem, size = 0x4, offset = 0x4, fixed_abs, tag = 'smem constant byte address 0x4 - core index']
  #allocation1 [shape = 'u32[72,128]{1,0:T(1,128)}', space=vmem, size = 0x9000, scoped, tag = 'internal scratch']
  %s0 = inlined_call_operand.hbm [shape: f32[2,784], index: 0, kind: input, shape index: {}]
  %s1 = inlined_call_operand.hbm [shape: bf16[784,512], index: 1, kind: input, shape index: {}]
  %s2 = inlined_call_operand.hbm [shape: f32[1,512], index: 2, kind: input, shape index: {}]
  %s3 = inlined_call_operand.hbm [shape: bf16[512,128], index: 3, kind: input, shape index: {}]
  %s4 = inlined_call_operand.vmem [shape: f32[1,128], index: 4, kind: input, shape index: {}]
  %s5 = inlined_call_operand.hbm [shape: f32[2,128], index: 5, kind: output, shape index: {}]
  %s6 = sld [smem:[#allocation0]]
  $region46: #{tpu_custom_call.1} parent=0
    _
  %s8 = ssub.s32 1, %s6
  %s9 = scalar_select 0, %s8, %s6
  $region1: #{tpu_custom_call.1} parent=0
    #allocation2 [shape = 'u8[7168]{0}', space=vmem, size = 0x1c00, scoped, tag = 'input window, operand 0, single buffered']
    #allocation3 [shape = 's32[1]{0}', space=sflag, size = 0x4, scoped, tag = 'scoped memory for tpu_custom_call.1']
    #allocation4 [shape = 's32[1]{0}', space=sflag, size = 0x4, scoped, tag = 'scoped memory for tpu_custom_call.1']
    #allocation5 [shape = 'u8[802816]{0}', space=vmem, size = 0xc4000, scoped, tag = 'input window, operand 1, single buffered']
    #allocation6 [shape = 's32[1]{0}', space=sflag, size = 0x4, scoped, tag = 'scoped memory for tpu_custom_call.1']
    #allocation7 [shape = 'u8[2048]{0}', space=vmem, size = 0x800, scoped, tag = 'input window, operand 2, single buffered']
    #allocation8 [shape = 'u8[131072]{0}', space=vmem, size = 0x20000, scoped, tag = 'input window, operand 3, single buffered']
    #allocation9 [shape = 's32[1]{0}', space=sflag, size = 0x4, scoped, tag = 'scoped memory for tpu_custom_call.1']
    #allocation10 [shape = 'u8[1024]{0}', space=vmem, size = 0x400, scoped, tag = 'output window, operand 0, single buffered']
    %10 = vsyncpa [#allocation3], 0
    %11 = vsyncpa [#allocation6], 0
    %12 = vsyncpa [#allocation9], 0
    %13 = vsyncpa [#allocation4], 0
    // Predicated region
    $region2: #{tpu_custom_call.1} parent=1 // pred_check
      _
    $region3: #{tpu_custom_call.1} parent=1 // pred_check_branch
      %15 = sbr.rel (0) target = $region5
    $region4: #{tpu_custom_call.1} parent=1 // pred_region
      %17 = vsyncadd [#allocation3], 0
      %s19 = sshll.u32 %s0, 4
      %s20 = int_to_ptr.hbm [resolvable:$true] %s19
      %s21 = sshll.u32 [#allocation2], 4
      %s22 = int_to_ptr.vmem [resolvable:$true] %s21
      %24 = dma.hbm_to_vmem [thread:$0]  %s20, 224, %s22, [#allocation3]
    $region5: #{tpu_custom_call.1} parent=1 // pred_fallthru
      _
    // Predicated region
    $region6: #{tpu_custom_call.1} parent=1 // pred_check
      _
    $region7: #{tpu_custom_call.1} parent=1 // pred_check_branch
      %26 = sbr.rel (0) target = $region9
    $region8: #{tpu_custom_call.1} parent=1 // pred_region
      %28 = vsyncadd [#allocation6], 0
      %s29 = sshll.u32 %s1, 4
      %s30 = int_to_ptr.hbm [resolvable:$true] %s29
      %s31 = sshll.u32 [#allocation5], 4
      %s32 = int_to_ptr.vmem [resolvable:$true] %s31
      %37 = dma.hbm_to_vmem [thread:$0]  %s30, 25088, %s32, [#allocation6], 256, 256, 16
    $region9: #{tpu_custom_call.1} parent=1 // pred_fallthru
      _
    // Predicated region
    $region10: #{tpu_custom_call.1} parent=1 // pred_check
      _
    $region11: #{tpu_custom_call.1} parent=1 // pred_check_branch
      %39 = sbr.rel (0) target = $region13
    $region12: #{tpu_custom_call.1} parent=1 // pred_region
      %41 = vsyncadd [#allocation6], 0
      %s43 = sshll.u32 %s2, 4
      %s44 = int_to_ptr.hbm [resolvable:$true] %s43
      %s45 = sshll.u32 [#allocation7], 4
      %s46 = int_to_ptr.vmem [resolvable:$true] %s45
      %48 = dma.hbm_to_vmem [thread:$0]  %s44, 64, %s46, [#allocation6]
    $region13: #{tpu_custom_call.1} parent=1 // pred_fallthru
      _
    // Predicated region
    $region14: #{tpu_custom_call.1} parent=1 // pred_check
      _
    $region15: #{tpu_custom_call.1} parent=1 // pred_check_branch
      %50 = sbr.rel (0) target = $region17
    $region16: #{tpu_custom_call.1} parent=1 // pred_region
      %52 = vsyncadd [#allocation9], 0
      %s53 = sshll.u32 %s3, 4
      %s54 = int_to_ptr.hbm [resolvable:$true] %s53
      %s55 = sshll.u32 [#allocation8], 4
      %s56 = int_to_ptr.vmem [resolvable:$true] %s55
      %61 = dma.hbm_to_vmem [thread:$0]  %s54, 4096, %s56, [#allocation9], 64, 64, 4
    $region17: #{tpu_custom_call.1} parent=1 // pred_fallthru
      _
    // Predicated region
    $region18: #{tpu_custom_call.1} parent=1 // pred_check
      _
    $region19: #{tpu_custom_call.1} parent=1 // pred_check_branch
      %63 = sbr.rel (0) target = $region21
    $region20: #{tpu_custom_call.1} parent=1 // pred_region
      _
    $region21: #{tpu_custom_call.1} parent=1 // pred_fallthru
      _
    // Predicated region
    $region22: #{tpu_custom_call.1} parent=1 // pred_check
      _
    $region23: #{tpu_custom_call.1} parent=1 // pred_check_branch
      %65 = sbr.rel (0) target = $region25
    $region24: #{tpu_custom_call.1} parent=1 // pred_region
      %67 = dma.done [#allocation3], 224
    $region25: #{tpu_custom_call.1} parent=1 // pred_fallthru
      _
    // Predicated region
    $region26: #{tpu_custom_call.1} parent=1 // pred_check
      _
    $region27: #{tpu_custom_call.1} parent=1 // pred_check_branch
      %69 = sbr.rel (0) target = $region29
    $region28: #{tpu_custom_call.1} parent=1 // pred_region
      %71 = dma.done [#allocation6], 25088
    $region29: #{tpu_custom_call.1} parent=1 // pred_fallthru
      _
    // Predicated region
    $region30: #{tpu_custom_call.1} parent=1 // pred_check
      _
    $region31: #{tpu_custom_call.1} parent=1 // pred_check_branch
      %73 = sbr.rel (0) target = $region33
    $region32: #{tpu_custom_call.1} parent=1 // pred_region
      %75 = dma.done [#allocation6], 64
    $region33: #{tpu_custom_call.1} parent=1 // pred_fallthru
      _
    // Predicated region
    $region34: #{tpu_custom_call.1} parent=1 // pred_check
      _
    $region35: #{tpu_custom_call.1} parent=1 // pred_check_branch
      %77 = sbr.rel (0) target = $region37
    $region36: #{tpu_custom_call.1} parent=1 // pred_region
      %79 = dma.done [#allocation9], 4096
    $region37: #{tpu_custom_call.1} parent=1 // pred_fallthru
      _
    %v81 = vld [vmem:[#allocation2] sm:$0xff]
    %v82 = vld [vmem:[#allocation2 + $0x8] sm:$0x3f]
    %85 = vst [vmem:[#allocation1] ss:$4 sm:$0xff] %v81
    %s86 = scalar_lea.vmem [#allocation1], 32
    %87 = vst [vmem:[%s86] ss:$4 sm:$0xff] %v82
    %v88 = vld.sshfl [vmem:[#allocation1] sm:$0xff pattern:$0x73625140]
    %v89 = vld.sshfl [vmem:[#allocation1 + $0x8] sm:$0xff pattern:$0x73625140]
    %v90 = vld.sshfl [vmem:[#allocation1 + $0x10] sm:$0xff pattern:$0x73625140]
    %v91 = vld.sshfl [vmem:[#allocation1 + $0x18] sm:$0xff pattern:$0x73625140]
    %v92 = vld.sshfl [vmem:[#allocation1 + $0x20] sm:$0xff pattern:$0x73625140]
    %v93 = vld.sshfl [vmem:[#allocation1 + $0x28] sm:$0xff pattern:$0x73625140]
    %v94 = vld.sshfl [vmem:[#allocation1 + $0x30] sm:$0xff pattern:$0x73625140]
    %v102 = vpack.c.bf16 %v88, %v88
    %v103 = vpack.c.bf16 %v89, %v89
    %v104 = vpack.c.bf16 %v90, %v90
    %v105 = vpack.c.bf16 %v91, %v91
    %v106 = vpack.c.bf16 %v92, %v92
    %v107 = vpack.c.bf16 %v93, %v93
    %v108 = vpack.c.bf16 %v94, %v94
    %v109 = vld [vmem:[#allocation5] sm:$0xff]
    %v110 = vld [vmem:[#allocation5 + $0x8] sm:$0xff]
    %v111 = vld [vmem:[#allocation5 + $0x10] sm:$0xff]
    %v112 = vld [vmem:[#allocation5 + $0x18] sm:$0xff]
    %v113 = vld [vmem:[#allocation5 + $0x20] sm:$0xff]
    %v114 = vld [vmem:[#allocation5 + $0x28] sm:$0xff]
    %v115 = vld [vmem:[#allocation5 + $0x30] sm:$0xff]
    %v116 = vld [vmem:[#allocation5 + $0x38] sm:$0xff]
    %v117 = vld [vmem:[#allocation5 + $0x40] sm:$0xff]
    %v118 = vld [vmem:[#allocation5 + $0x48] sm:$0xff]
    %v119 = vld [vmem:[#allocation5 + $0x50] sm:$0xff]
    %v120 = vld [vmem:[#allocation5 + $0x58] sm:$0xff]
    %v121 = vld [vmem:[#allocation5 + $0x60] sm:$0xff]
    %v122 = vld [vmem:[#allocation5 + $0x68] sm:$0xff]
    %v123 = vld [vmem:[#allocation5 + $0x70] sm:$0xff]
    %v124 = vld [vmem:[#allocation5 + $0x78] sm:$0xff]
    %v125 = vld [vmem:[#allocation5 + $0x80] sm:$0xff]
    %v126 = vld [vmem:[#allocation5 + $0x88] sm:$0xff]
    %v127 = vld [vmem:[#allocation5 + $0x90] sm:$0xff]
    %v128 = vld [vmem:[#allocation5 + $0x98] sm:$0xff]
    %v129 = vld [vmem:[#allocation5 + $0xa0] sm:$0xff]
    %v130 = vld [vmem:[#allocation5 + $0xa8] sm:$0xff]
    %v131 = vld [vmem:[#allocation5 + $0xb0] sm:$0xff]
    %v132 = vld [vmem:[#allocation5 + $0xb8] sm:$0xff]
    %v133 = vld [vmem:[#allocation5 + $0xc0] sm:$0xff]
    %v134 = vld [vmem:[#allocation5 + $0xc8] sm:$0xff]
    %v135 = vld [vmem:[#allocation5 + $0xd0] sm:$0xff]
    %v136 = vld [vmem:[#allocation5 + $0xd8] sm:$0xff]
    %v137 = vld [vmem:[#allocation5 + $0xe0] sm:$0xff]
    %v138 = vld [vmem:[#allocation5 + $0xe8] sm:$0xff]
    %v139 = vld [vmem:[#allocation5 + $0xf0] sm:$0xff]
    %v140 = vld [vmem:[#allocation5 + $0xf8] sm:$0xff]
    %v141 = vld [vmem:[#allocation5 + $0x100] sm:$0xff]
    %v142 = vld [vmem:[#allocation5 + $0x108] sm:$0xff]
    %v143 = vld [vmem:[#allocation5 + $0x110] sm:$0xff]
    %v144 = vld [vmem:[#allocation5 + $0x118] sm:$0xff]
    %v145 = vld [vmem:[#allocation5 + $0x120] sm:$0xff]
    %v146 = vld [vmem:[#allocation5 + $0x128] sm:$0xff]
    %v147 = vld [vmem:[#allocation5 + $0x130] sm:$0xff]
    %v148 = vld [vmem:[#allocation5 + $0x138] sm:$0xff]
    %v149 = vld [vmem:[#allocation5 + $0x140] sm:$0xff]
    %v150 = vld [vmem:[#allocation5 + $0x148] sm:$0xff]
    %v151 = vld [vmem:[#allocation5 + $0x150] sm:$0xff]
    %v152 = vld [vmem:[#allocation5 + $0x158] sm:$0xff]
    %v153 = vld [vmem:[#allocation5 + $0x160] sm:$0xff]
    %v154 = vld [vmem:[#allocation5 + $0x168] sm:$0xff]
    %v155 = vld [vmem:[#allocation5 + $0x170] sm:$0xff]
    %v156 = vld [vmem:[#allocation5 + $0x178] sm:$0xff]
    %v157 = vld [vmem:[#allocation5 + $0x180] sm:$0xff]
    %v158 = vld [vmem:[#allocation5 + $0x188] sm:$0xff]
    %v159 = vld [vmem:[#allocation5 + $0x190] sm:$0xff]
    %v160 = vld [vmem:[#allocation5 + $0x198] sm:$0xff]
    %v161 = vld [vmem:[#allocation5 + $0x1a0] sm:$0xff]
    %v162 = vld [vmem:[#allocation5 + $0x1a8] sm:$0xff]
    %v163 = vld [vmem:[#allocation5 + $0x1b0] sm:$0xff]
    %v164 = vld [vmem:[#allocation5 + $0x1b8] sm:$0xff]
    %v165 = vld [vmem:[#allocation5 + $0x1c0] sm:$0xff]
    %v166 = vld [vmem:[#allocation5 + $0x1c8] sm:$0xff]
    %v167 = vld [vmem:[#allocation5 + $0x1d0] sm:$0xff]
    %v168 = vld [vmem:[#allocation5 + $0x1d8] sm:$0xff]
    %v169 = vld [vmem:[#allocation5 + $0x1e0] sm:$0xff]
    %v170 = vld [vmem:[#allocation5 + $0x1e8] sm:$0xff]
    %v171 = vld [vmem:[#allocation5 + $0x1f0] sm:$0xff]
    %v172 = vld [vmem:[#allocation5 + $0x1f8] sm:$0xff]
    %v173 = vld [vmem:[#allocation5 + $0x200] sm:$0xff]
    %v174 = vld [vmem:[#allocation5 + $0x208] sm:$0xff]
    %v175 = vld [vmem:[#allocation5 + $0x210] sm:$0xff]
    %v176 = vld [vmem:[#allocation5 + $0x218] sm:$0xff]
    %v177 = vld [vmem:[#allocation5 + $0x220] sm:$0xff]
    %v178 = vld [vmem:[#allocation5 + $0x228] sm:$0xff]
    %v179 = vld [vmem:[#allocation5 + $0x230] sm:$0xff]
    %v180 = vld [vmem:[#allocation5 + $0x238] sm:$0xff]
    %v181 = vld [vmem:[#allocation5 + $0x240] sm:$0xff]
    %v182 = vld [vmem:[#allocation5 + $0x248] sm:$0xff]
    %v183 = vld [vmem:[#allocation5 + $0x250] sm:$0xff]
    %v184 = vld [vmem:[#allocation5 + $0x258] sm:$0xff]
    %v185 = vld [vmem:[#allocation5 + $0x260] sm:$0xff]
    %v186 = vld [vmem:[#allocation5 + $0x268] sm:$0xff]
    %v187 = vld [vmem:[#allocation5 + $0x270] sm:$0xff]
    %v188 = vld [vmem:[#allocation5 + $0x278] sm:$0xff]
    %v189 = vld [vmem:[#allocation5 + $0x280] sm:$0xff]
    %v190 = vld [vmem:[#allocation5 + $0x288] sm:$0xff]
    %v191 = vld [vmem:[#allocation5 + $0x290] sm:$0xff]
    %v192 = vld [vmem:[#allocation5 + $0x298] sm:$0xff]
    %v193 = vld [vmem:[#allocation5 + $0x2a0] sm:$0xff]
    %v194 = vld [vmem:[#allocation5 + $0x2a8] sm:$0xff]
    %v195 = vld [vmem:[#allocation5 + $0x2b0] sm:$0xff]
    %v196 = vld [vmem:[#allocation5 + $0x2b8] sm:$0xff]
    %v197 = vld [vmem:[#allocation5 + $0x2c0] sm:$0xff]
    %v198 = vld [vmem:[#allocation5 + $0x2c8] sm:$0xff]
    %v199 = vld [vmem:[#allocation5 + $0x2d0] sm:$0xff]
    %v200 = vld [vmem:[#allocation5 + $0x2d8] sm:$0xff]
    %v201 = vld [vmem:[#allocation5 + $0x2e0] sm:$0xff]
    %v202 = vld [vmem:[#allocation5 + $0x2e8] sm:$0xff]
    %v203 = vld [vmem:[#allocation5 + $0x2f0] sm:$0xff]
    %v204 = vld [vmem:[#allocation5 + $0x2f8] sm:$0xff]
    %v205 = vld [vmem:[#allocation5 + $0x300] sm:$0xff]
    %v206 = vld [vmem:[#allocation5 + $0x308] sm:$0xff]
    %v207 = vld [vmem:[#allocation5 + $0x310] sm:$0xff]
    %v208 = vld [vmem:[#allocation5 + $0x318] sm:$0xff]
    %v209 = vld [vmem:[#allocation5 + $0x320] sm:$0xff]
    %v210 = vld [vmem:[#allocation5 + $0x328] sm:$0xff]
    %v211 = vld [vmem:[#allocation5 + $0x330] sm:$0xff]
    %v212 = vld [vmem:[#allocation5 + $0x338] sm:$0xff]
    %v213 = vld [vmem:[#allocation5 + $0x340] sm:$0xff]
    %v214 = vld [vmem:[#allocation5 + $0x348] sm:$0xff]
    %v215 = vld [vmem:[#allocation5 + $0x350] sm:$0xff]
    %v216 = vld [vmem:[#allocation5 + $0x358] sm:$0xff]
    %v217 = vld [vmem:[#allocation5 + $0x360] sm:$0xff]
    %v218 = vld [vmem:[#allocation5 + $0x368] sm:$0xff]
    %v219 = vld [vmem:[#allocation5 + $0x370] sm:$0xff]
    %v220 = vld [vmem:[#allocation5 + $0x378] sm:$0xff]
    %v221 = vld [vmem:[#allocation5 + $0x380] sm:$0xff]
    %v222 = vld [vmem:[#allocation5 + $0x388] sm:$0xff]
    %v223 = vld [vmem:[#allocation5 + $0x390] sm:$0xff]
    %v224 = vld [vmem:[#allocation5 + $0x398] sm:$0xff]
    %v225 = vld [vmem:[#allocation5 + $0x3a0] sm:$0xff]
    %v226 = vld [vmem:[#allocation5 + $0x3a8] sm:$0xff]
    %v227 = vld [vmem:[#allocation5 + $0x3b0] sm:$0xff]
    %v228 = vld [vmem:[#allocation5 + $0x3b8] sm:$0xff]
    %v229 = vld [vmem:[#allocation5 + $0x3c0] sm:$0xff]
    %v230 = vld [vmem:[#allocation5 + $0x3c8] sm:$0xff]
    %v231 = vld [vmem:[#allocation5 + $0x3d0] sm:$0xff]
    %v232 = vld [vmem:[#allocation5 + $0x3d8] sm:$0xff]
    %v233 = vld [vmem:[#allocation5 + $0x3e0] sm:$0xff]
    %v234 = vld [vmem:[#allocation5 + $0x3e8] sm:$0xff]
    %v235 = vld [vmem:[#allocation5 + $0x3f0] sm:$0xff]
    %v236 = vld [vmem:[#allocation5 + $0x3f8] sm:$0xff]
    %v237 = vld [vmem:[#allocation5 + $0x400] sm:$0xff]
    %v238 = vld [vmem:[#allocation5 + $0x408] sm:$0xff]
    %v239 = vld [vmem:[#allocation5 + $0x410] sm:$0xff]
    %v240 = vld [vmem:[#allocation5 + $0x418] sm:$0xff]
    %v241 = vld [vmem:[#allocation5 + $0x420] sm:$0xff]
    %v242 = vld [vmem:[#allocation5 + $0x428] sm:$0xff]
    %v243 = vld [vmem:[#allocation5 + $0x430] sm:$0xff]
    %v244 = vld [vmem:[#allocation5 + $0x438] sm:$0xff]
    %v245 = vld [vmem:[#allocation5 + $0x440] sm:$0xff]
    %v246 = vld [vmem:[#allocation5 + $0x448] sm:$0xff]
    %v247 = vld [vmem:[#allocation5 + $0x450] sm:$0xff]
    %v248 = vld [vmem:[#allocation5 + $0x458] sm:$0xff]
    %v249 = vld [vmem:[#allocation5 + $0x460] sm:$0xff]
    %v250 = vld [vmem:[#allocation5 + $0x468] sm:$0xff]
    %v251 = vld [vmem:[#allocation5 + $0x470] sm:$0xff]
    %v252 = vld [vmem:[#allocation5 + $0x478] sm:$0xff]
    %v253 = vld [vmem:[#allocation5 + $0x480] sm:$0xff]
    %v254 = vld [vmem:[#allocation5 + $0x488] sm:$0xff]
    %v255 = vld [vmem:[#allocation5 + $0x490] sm:$0xff]
    %v256 = vld [vmem:[#allocation5 + $0x498] sm:$0xff]
    %v257 = vld [vmem:[#allocation5 + $0x4a0] sm:$0xff]
    %v258 = vld [vmem:[#allocation5 + $0x4a8] sm:$0xff]
    %v259 = vld [vmem:[#allocation5 + $0x4b0] sm:$0xff]
    %v260 = vld [vmem:[#allocation5 + $0x4b8] sm:$0xff]
    %v261 = vld [vmem:[#allocation5 + $0x4c0] sm:$0xff]
    %v262 = vld [vmem:[#allocation5 + $0x4c8] sm:$0xff]
    %v263 = vld [vmem:[#allocation5 + $0x4d0] sm:$0xff]
    %v264 = vld [vmem:[#allocation5 + $0x4d8] sm:$0xff]
    %v265 = vld [vmem:[#allocation5 + $0x4e0] sm:$0xff]
    %v266 = vld [vmem:[#allocation5 + $0x4e8] sm:$0xff]
    %v267 = vld [vmem:[#allocation5 + $0x4f0] sm:$0xff]
    %v268 = vld [vmem:[#allocation5 + $0x4f8] sm:$0xff]
    %v269 = vld [vmem:[#allocation5 + $0x500] sm:$0xff]
    %v270 = vld [vmem:[#allocation5 + $0x508] sm:$0xff]
    %v271 = vld [vmem:[#allocation5 + $0x510] sm:$0xff]
    %v272 = vld [vmem:[#allocation5 + $0x518] sm:$0xff]
    %v273 = vld [vmem:[#allocation5 + $0x520] sm:$0xff]
    %v274 = vld [vmem:[#allocation5 + $0x528] sm:$0xff]
    %v275 = vld [vmem:[#allocation5 + $0x530] sm:$0xff]
    %v276 = vld [vmem:[#allocation5 + $0x538] sm:$0xff]
    %v277 = vld [vmem:[#allocation5 + $0x540] sm:$0xff]
    %v278 = vld [vmem:[#allocation5 + $0x548] sm:$0xff]
    %v279 = vld [vmem:[#allocation5 + $0x550] sm:$0xff]
    %v280 = vld [vmem:[#allocation5 + $0x558] sm:$0xff]
    %v281 = vld [vmem:[#allocation5 + $0x560] sm:$0xff]
    %v282 = vld [vmem:[#allocation5 + $0x568] sm:$0xff]
    %v283 = vld [vmem:[#allocation5 + $0x570] sm:$0xff]
    %v284 = vld [vmem:[#allocation5 + $0x578] sm:$0xff]
    %v285 = vld [vmem:[#allocation5 + $0x580] sm:$0xff]
    %v286 = vld [vmem:[#allocation5 + $0x588] sm:$0xff]
    %v287 = vld [vmem:[#allocation5 + $0x590] sm:$0xff]
    %v288 = vld [vmem:[#allocation5 + $0x598] sm:$0xff]
    %v289 = vld [vmem:[#allocation5 + $0x5a0] sm:$0xff]
    %v290 = vld [vmem:[#allocation5 + $0x5a8] sm:$0xff]
    %v291 = vld [vmem:[#allocation5 + $0x5b0] sm:$0xff]
    %v292 = vld [vmem:[#allocation5 + $0x5b8] sm:$0xff]
    %v293 = vld [vmem:[#allocation5 + $0x5c0] sm:$0xff]
    %v294 = vld [vmem:[#allocation5 + $0x5c8] sm:$0xff]
    %v295 = vld [vmem:[#allocation5 + $0x5d0] sm:$0xff]
    %v296 = vld [vmem:[#allocation5 + $0x5d8] sm:$0xff]
    %v297 = vld [vmem:[#allocation5 + $0x5e0] sm:$0xff]
    %v298 = vld [vmem:[#allocation5 + $0x5e8] sm:$0xff]
    %v299 = vld [vmem:[#allocation5 + $0x5f0] sm:$0xff]
    %v300 = vld [vmem:[#allocation5 + $0x5f8] sm:$0xff]
    %v301 = vld [vmem:[#allocation5 + $0x600] sm:$0xff]
    %v302 = vld [vmem:[#allocation5 + $0x608] sm:$0xff]
    %v303 = vld [vmem:[#allocation5 + $0x610] sm:$0xff]
    %v304 = vld [vmem:[#allocation5 + $0x618] sm:$0xff]
    %v305 = vld [vmem:[#allocation7] sm:$0xf]
    %v307 = vperm.slane %v305, 0
    %v308 = vperm.slane %v305, 1
    %v309 = vperm.slane %v305, 2
    %v310 = vperm.slane %v305, 3
    %v511 = vunpack.c.l.b16 %v109
    %v512 = vunpack.c.h.b16 %v109
    %v513 = vunpack.c.l.b16 %v110
    %v514 = vunpack.c.h.b16 %v110
    %v515 = vunpack.c.l.b16 %v111
    %v516 = vunpack.c.h.b16 %v111
    %v517 = vunpack.c.l.b16 %v112
    %v518 = vunpack.c.h.b16 %v112
    %v519 = vunpack.c.l.b16 %v113
    %v520 = vunpack.c.h.b16 %v113
    %v521 = vunpack.c.l.b16 %v114
    %v522 = vunpack.c.h.b16 %v114
    %v523 = vunpack.c.l.b16 %v115
    %v524 = vunpack.c.h.b16 %v115
    %v525 = vunpack.c.l.b16 %v116
    %v526 = vunpack.c.h.b16 %v116
    %v527 = vunpack.c.l.b16 %v117
    %v528 = vunpack.c.h.b16 %v117
    %v529 = vunpack.c.l.b16 %v118
    %v530 = vunpack.c.h.b16 %v118
    %v531 = vunpack.c.l.b16 %v119
    %v532 = vunpack.c.h.b16 %v119
    %v533 = vunpack.c.l.b16 %v120
    %v534 = vunpack.c.h.b16 %v120
    %v535 = vunpack.c.l.b16 %v121
    %v536 = vunpack.c.h.b16 %v121
    %v537 = vunpack.c.l.b16 %v122
    %v538 = vunpack.c.h.b16 %v122
    %v539 = vunpack.c.l.b16 %v123
    %v540 = vunpack.c.h.b16 %v123
    %v541 = vunpack.c.l.b16 %v124
    %v542 = vunpack.c.h.b16 %v124
    %v543 = vunpack.c.l.b16 %v125
    %v544 = vunpack.c.h.b16 %v125
    %v545 = vunpack.c.l.b16 %v126
    %v546 = vunpack.c.h.b16 %v126
    %v547 = vunpack.c.l.b16 %v127
    %v548 = vunpack.c.h.b16 %v127
    %v549 = vunpack.c.l.b16 %v128
    %v550 = vunpack.c.h.b16 %v128
    %v551 = vunpack.c.l.b16 %v129
    %v552 = vunpack.c.h.b16 %v129
    %v553 = vunpack.c.l.b16 %v130
    %v554 = vunpack.c.h.b16 %v130
    %v555 = vunpack.c.l.b16 %v131
    %v556 = vunpack.c.h.b16 %v131
    %v557 = vunpack.c.l.b16 %v132
    %v558 = vunpack.c.h.b16 %v132
    %v559 = vunpack.c.l.b16 %v133
    %v560 = vunpack.c.h.b16 %v133
    %v561 = vunpack.c.l.b16 %v134
    %v562 = vunpack.c.h.b16 %v134
    %v563 = vunpack.c.l.b16 %v135
    %v564 = vunpack.c.h.b16 %v135
    %v565 = vunpack.c.l.b16 %v136
    %v566 = vunpack.c.h.b16 %v136
    %v567 = vunpack.c.l.b16 %v137
    %v568 = vunpack.c.h.b16 %v137
    %v569 = vunpack.c.l.b16 %v138
    %v570 = vunpack.c.h.b16 %v138
    %v571 = vunpack.c.l.b16 %v139
    %v572 = vunpack.c.h.b16 %v139
    %v573 = vunpack.c.l.b16 %v140
    %v574 = vunpack.c.h.b16 %v140
    %v575 = vunpack.c.l.b16 %v141
    %v576 = vunpack.c.h.b16 %v141
    %v577 = vunpack.c.l.b16 %v142
    %v578 = vunpack.c.h.b16 %v142
    %v579 = vunpack.c.l.b16 %v143
    %v580 = vunpack.c.h.b16 %v143
    %v581 = vunpack.c.l.b16 %v144
    %v582 = vunpack.c.h.b16 %v144
    %v583 = vunpack.c.l.b16 %v145
    %v584 = vunpack.c.h.b16 %v145
    %v585 = vunpack.c.l.b16 %v146
    %v586 = vunpack.c.h.b16 %v146
    %v587 = vunpack.c.l.b16 %v147
    %v588 = vunpack.c.h.b16 %v147
    %v589 = vunpack.c.l.b16 %v148
    %v590 = vunpack.c.h.b16 %v148
    %v591 = vunpack.c.l.b16 %v149
    %v592 = vunpack.c.h.b16 %v149
    %v593 = vunpack.c.l.b16 %v150
    %v594 = vunpack.c.h.b16 %v150
    %v595 = vunpack.c.l.b16 %v151
    %v596 = vunpack.c.h.b16 %v151
    %v597 = vunpack.c.l.b16 %v152
    %v598 = vunpack.c.h.b16 %v152
    %v599 = vunpack.c.l.b16 %v153
    %v600 = vunpack.c.h.b16 %v153
    %v601 = vunpack.c.l.b16 %v154
    %v602 = vunpack.c.h.b16 %v154
    %v603 = vunpack.c.l.b16 %v155
    %v604 = vunpack.c.h.b16 %v155
    %v605 = vunpack.c.l.b16 %v156
    %v606 = vunpack.c.h.b16 %v156
    %v607 = vunpack.c.l.b16 %v157
    %v608 = vunpack.c.h.b16 %v157
    %v609 = vunpack.c.l.b16 %v158
    %v610 = vunpack.c.h.b16 %v158
    %v611 = vunpack.c.l.b16 %v159
    %v612 = vunpack.c.h.b16 %v159
    %v613 = vunpack.c.l.b16 %v160
    %v614 = vunpack.c.h.b16 %v160
    %v615 = vunpack.c.l.b16 %v161
    %v616 = vunpack.c.h.b16 %v161
    %v617 = vunpack.c.l.b16 %v162
    %v618 = vunpack.c.h.b16 %v162
    %v619 = vunpack.c.l.b16 %v163
    %v620 = vunpack.c.h.b16 %v163
    %v621 = vunpack.c.l.b16 %v164
    %v622 = vunpack.c.h.b16 %v164
    %v623 = vunpack.c.l.b16 %v165
    %v624 = vunpack.c.h.b16 %v165
    %v625 = vunpack.c.l.b16 %v166
    %v626 = vunpack.c.h.b16 %v166
    %v627 = vunpack.c.l.b16 %v167
    %v628 = vunpack.c.h.b16 %v167
    %v629 = vunpack.c.l.b16 %v168
    %v630 = vunpack.c.h.b16 %v168
    %v631 = vunpack.c.l.b16 %v169
    %v632 = vunpack.c.h.b16 %v169
    %v633 = vunpack.c.l.b16 %v170
    %v634 = vunpack.c.h.b16 %v170
    %v635 = vunpack.c.l.b16 %v171
    %v636 = vunpack.c.h.b16 %v171
    %v637 = vunpack.c.l.b16 %v172
    %v638 = vunpack.c.h.b16 %v172
    %v639 = vunpack.c.l.b16 %v173
    %v640 = vunpack.c.h.b16 %v173
    %v641 = vunpack.c.l.b16 %v174
    %v642 = vunpack.c.h.b16 %v174
    %v643 = vunpack.c.l.b16 %v175
    %v644 = vunpack.c.h.b16 %v175
    %v645 = vunpack.c.l.b16 %v176
    %v646 = vunpack.c.h.b16 %v176
    %v647 = vunpack.c.l.b16 %v177
    %v648 = vunpack.c.h.b16 %v177
    %v649 = vunpack.c.l.b16 %v178
    %v650 = vunpack.c.h.b16 %v178
    %v651 = vunpack.c.l.b16 %v179
    %v652 = vunpack.c.h.b16 %v179
    %v653 = vunpack.c.l.b16 %v180
    %v654 = vunpack.c.h.b16 %v180
    %v655 = vunpack.c.l.b16 %v181
    %v656 = vunpack.c.h.b16 %v181
    %v657 = vunpack.c.l.b16 %v182
    %v658 = vunpack.c.h.b16 %v182
    %v659 = vunpack.c.l.b16 %v183
    %v660 = vunpack.c.h.b16 %v183
    %v661 = vunpack.c.l.b16 %v184
    %v662 = vunpack.c.h.b16 %v184
    %v663 = vunpack.c.l.b16 %v185
    %v664 = vunpack.c.h.b16 %v185
    %v665 = vunpack.c.l.b16 %v186
    %v666 = vunpack.c.h.b16 %v186
    %v667 = vunpack.c.l.b16 %v187
    %v668 = vunpack.c.h.b16 %v187
    %v669 = vunpack.c.l.b16 %v188
    %v670 = vunpack.c.h.b16 %v188
    %v671 = vunpack.c.l.b16 %v189
    %v672 = vunpack.c.h.b16 %v189
    %v673 = vunpack.c.l.b16 %v190
    %v674 = vunpack.c.h.b16 %v190
    %v675 = vunpack.c.l.b16 %v191
    %v676 = vunpack.c.h.b16 %v191
    %v677 = vunpack.c.l.b16 %v192
    %v678 = vunpack.c.h.b16 %v192
    %v679 = vunpack.c.l.b16 %v193
    %v680 = vunpack.c.h.b16 %v193
    %v681 = vunpack.c.l.b16 %v194
    %v682 = vunpack.c.h.b16 %v194
    %v683 = vunpack.c.l.b16 %v195
    %v684 = vunpack.c.h.b16 %v195
    %v685 = vunpack.c.l.b16 %v196
    %v686 = vunpack.c.h.b16 %v196
    %v687 = vunpack.c.l.b16 %v197
    %v688 = vunpack.c.h.b16 %v197
    %v689 = vunpack.c.l.b16 %v198
    %v690 = vunpack.c.h.b16 %v198
    %v691 = vunpack.c.l.b16 %v199
    %v692 = vunpack.c.h.b16 %v199
    %v693 = vunpack.c.l.b16 %v200
    %v694 = vunpack.c.h.b16 %v200
    %v695 = vunpack.c.l.b16 %v201
    %v696 = vunpack.c.h.b16 %v201
    %v697 = vunpack.c.l.b16 %v202
    %v698 = vunpack.c.h.b16 %v202
    %v699 = vunpack.c.l.b16 %v203
    %v700 = vunpack.c.h.b16 %v203
    %v701 = vunpack.c.l.b16 %v204
    %v702 = vunpack.c.h.b16 %v204
    %v703 = vunpack.c.l.b16 %v205
    %v704 = vunpack.c.h.b16 %v205
    %v705 = vunpack.c.l.b16 %v206
    %v706 = vunpack.c.h.b16 %v206
    %v707 = vunpack.c.l.b16 %v207
    %v708 = vunpack.c.h.b16 %v207
    %v709 = vunpack.c.l.b16 %v208
    %v710 = vunpack.c.h.b16 %v208
    %v711 = vunpack.c.l.b16 %v209
    %v712 = vunpack.c.h.b16 %v209
    %v713 = vunpack.c.l.b16 %v210
    %v714 = vunpack.c.h.b16 %v210
    %v715 = vunpack.c.l.b16 %v211
    %v716 = vunpack.c.h.b16 %v211
    %v717 = vunpack.c.l.b16 %v212
    %v718 = vunpack.c.h.b16 %v212
    %v719 = vunpack.c.l.b16 %v213
    %v720 = vunpack.c.h.b16 %v213
    %v721 = vunpack.c.l.b16 %v214
    %v722 = vunpack.c.h.b16 %v214
    %v723 = vunpack.c.l.b16 %v215
    %v724 = vunpack.c.h.b16 %v215
    %v725 = vunpack.c.l.b16 %v216
    %v726 = vunpack.c.h.b16 %v216
    %v727 = vunpack.c.l.b16 %v217
    %v728 = vunpack.c.h.b16 %v217
    %v729 = vunpack.c.l.b16 %v218
    %v730 = vunpack.c.h.b16 %v218
    %v731 = vunpack.c.l.b16 %v219
    %v732 = vunpack.c.h.b16 %v219
    %v733 = vunpack.c.l.b16 %v220
    %v734 = vunpack.c.h.b16 %v220
    %v735 = vunpack.c.l.b16 %v221
    %v736 = vunpack.c.h.b16 %v221
    %v737 = vunpack.c.l.b16 %v222
    %v738 = vunpack.c.h.b16 %v222
    %v739 = vunpack.c.l.b16 %v223
    %v740 = vunpack.c.h.b16 %v223
    %v741 = vunpack.c.l.b16 %v224
    %v742 = vunpack.c.h.b16 %v224
    %v743 = vunpack.c.l.b16 %v225
    %v744 = vunpack.c.h.b16 %v225
    %v745 = vunpack.c.l.b16 %v226
    %v746 = vunpack.c.h.b16 %v226
    %v747 = vunpack.c.l.b16 %v227
    %v748 = vunpack.c.h.b16 %v227
    %v749 = vunpack.c.l.b16 %v228
    %v750 = vunpack.c.h.b16 %v228
    %v751 = vunpack.c.l.b16 %v229
    %v752 = vunpack.c.h.b16 %v229
    %v753 = vunpack.c.l.b16 %v230
    %v754 = vunpack.c.h.b16 %v230
    %v755 = vunpack.c.l.b16 %v231
    %v756 = vunpack.c.h.b16 %v231
    %v757 = vunpack.c.l.b16 %v232
    %v758 = vunpack.c.h.b16 %v232
    %v759 = vunpack.c.l.b16 %v233
    %v760 = vunpack.c.h.b16 %v233
    %v761 = vunpack.c.l.b16 %v234
    %v762 = vunpack.c.h.b16 %v234
    %v763 = vunpack.c.l.b16 %v235
    %v764 = vunpack.c.h.b16 %v235
    %v765 = vunpack.c.l.b16 %v236
    %v766 = vunpack.c.h.b16 %v236
    %v767 = vunpack.c.l.b16 %v237
    %v768 = vunpack.c.h.b16 %v237
    %v769 = vunpack.c.l.b16 %v238
    %v770 = vunpack.c.h.b16 %v238
    %v771 = vunpack.c.l.b16 %v239
    %v772 = vunpack.c.h.b16 %v239
    %v773 = vunpack.c.l.b16 %v240
    %v774 = vunpack.c.h.b16 %v240
    %v775 = vunpack.c.l.b16 %v241
    %v776 = vunpack.c.h.b16 %v241
    %v777 = vunpack.c.l.b16 %v242
    %v778 = vunpack.c.h.b16 %v242
    %v779 = vunpack.c.l.b16 %v243
    %v780 = vunpack.c.h.b16 %v243
    %v781 = vunpack.c.l.b16 %v244
    %v782 = vunpack.c.h.b16 %v244
    %v783 = vunpack.c.l.b16 %v245
    %v784 = vunpack.c.h.b16 %v245
    %v785 = vunpack.c.l.b16 %v246
    %v786 = vunpack.c.h.b16 %v246
    %v787 = vunpack.c.l.b16 %v247
    %v788 = vunpack.c.h.b16 %v247
    %v789 = vunpack.c.l.b16 %v248
    %v790 = vunpack.c.h.b16 %v248
    %v791 = vunpack.c.l.b16 %v249
    %v792 = vunpack.c.h.b16 %v249
    %v793 = vunpack.c.l.b16 %v250
    %v794 = vunpack.c.h.b16 %v250
    %v795 = vunpack.c.l.b16 %v251
    %v796 = vunpack.c.h.b16 %v251
    %v797 = vunpack.c.l.b16 %v252
    %v798 = vunpack.c.h.b16 %v252
    %v799 = vunpack.c.l.b16 %v253
    %v800 = vunpack.c.h.b16 %v253
    %v801 = vunpack.c.l.b16 %v254
    %v802 = vunpack.c.h.b16 %v254
    %v803 = vunpack.c.l.b16 %v255
    %v804 = vunpack.c.h.b16 %v255
    %v805 = vunpack.c.l.b16 %v256
    %v806 = vunpack.c.h.b16 %v256
    %v807 = vunpack.c.l.b16 %v257
    %v808 = vunpack.c.h.b16 %v257
    %v809 = vunpack.c.l.b16 %v258
    %v810 = vunpack.c.h.b16 %v258
    %v811 = vunpack.c.l.b16 %v259
    %v812 = vunpack.c.h.b16 %v259
    %v813 = vunpack.c.l.b16 %v260
    %v814 = vunpack.c.h.b16 %v260
    %v815 = vunpack.c.l.b16 %v261
    %v816 = vunpack.c.h.b16 %v261
    %v817 = vunpack.c.l.b16 %v262
    %v818 = vunpack.c.h.b16 %v262
    %v819 = vunpack.c.l.b16 %v263
    %v820 = vunpack.c.h.b16 %v263
    %v821 = vunpack.c.l.b16 %v264
    %v822 = vunpack.c.h.b16 %v264
    %v823 = vunpack.c.l.b16 %v265
    %v824 = vunpack.c.h.b16 %v265
    %v825 = vunpack.c.l.b16 %v266
    %v826 = vunpack.c.h.b16 %v266
    %v827 = vunpack.c.l.b16 %v267
    %v828 = vunpack.c.h.b16 %v267
    %v829 = vunpack.c.l.b16 %v268
    %v830 = vunpack.c.h.b16 %v268
    %v831 = vunpack.c.l.b16 %v269
    %v832 = vunpack.c.h.b16 %v269
    %v833 = vunpack.c.l.b16 %v270
    %v834 = vunpack.c.h.b16 %v270
    %v835 = vunpack.c.l.b16 %v271
    %v836 = vunpack.c.h.b16 %v271
    %v837 = vunpack.c.l.b16 %v272
    %v838 = vunpack.c.h.b16 %v272
    %v839 = vunpack.c.l.b16 %v273
    %v840 = vunpack.c.h.b16 %v273
    %v841 = vunpack.c.l.b16 %v274
    %v842 = vunpack.c.h.b16 %v274
    %v843 = vunpack.c.l.b16 %v275
    %v844 = vunpack.c.h.b16 %v275
    %v845 = vunpack.c.l.b16 %v276
    %v846 = vunpack.c.h.b16 %v276
    %v847 = vunpack.c.l.b16 %v277
    %v848 = vunpack.c.h.b16 %v277
    %v849 = vunpack.c.l.b16 %v278
    %v850 = vunpack.c.h.b16 %v278
    %v851 = vunpack.c.l.b16 %v279
    %v852 = vunpack.c.h.b16 %v279
    %v853 = vunpack.c.l.b16 %v280
    %v854 = vunpack.c.h.b16 %v280
    %v855 = vunpack.c.l.b16 %v281
    %v856 = vunpack.c.h.b16 %v281
    %v857 = vunpack.c.l.b16 %v282
    %v858 = vunpack.c.h.b16 %v282
    %v859 = vunpack.c.l.b16 %v283
    %v860 = vunpack.c.h.b16 %v283
    %v861 = vunpack.c.l.b16 %v284
    %v862 = vunpack.c.h.b16 %v284
    %v863 = vunpack.c.l.b16 %v285
    %v864 = vunpack.c.h.b16 %v285
    %v865 = vunpack.c.l.b16 %v286
    %v866 = vunpack.c.h.b16 %v286
    %v867 = vunpack.c.l.b16 %v287
    %v868 = vunpack.c.h.b16 %v287
    %v869 = vunpack.c.l.b16 %v288
    %v870 = vunpack.c.h.b16 %v288
    %v871 = vunpack.c.l.b16 %v289
    %v872 = vunpack.c.h.b16 %v289
    %v873 = vunpack.c.l.b16 %v290
    %v874 = vunpack.c.h.b16 %v290
    %v875 = vunpack.c.l.b16 %v291
    %v876 = vunpack.c.h.b16 %v291
    %v877 = vunpack.c.l.b16 %v292
    %v878 = vunpack.c.h.b16 %v292
    %v879 = vunpack.c.l.b16 %v293
    %v880 = vunpack.c.h.b16 %v293
    %v881 = vunpack.c.l.b16 %v294
    %v882 = vunpack.c.h.b16 %v294
    %v883 = vunpack.c.l.b16 %v295
    %v884 = vunpack.c.h.b16 %v295
    %v885 = vunpack.c.l.b16 %v296
    %v886 = vunpack.c.h.b16 %v296
    %v887 = vunpack.c.l.b16 %v297
    %v888 = vunpack.c.h.b16 %v297
    %v889 = vunpack.c.l.b16 %v298
    %v890 = vunpack.c.h.b16 %v298
    %v891 = vunpack.c.l.b16 %v299
    %v892 = vunpack.c.h.b16 %v299
    %v893 = vunpack.c.l.b16 %v300
    %v894 = vunpack.c.h.b16 %v300
    %v895 = vunpack.c.l.b16 %v301
    %v896 = vunpack.c.h.b16 %v301
    %v897 = vunpack.c.l.b16 %v302
    %v898 = vunpack.c.h.b16 %v302
    %v899 = vunpack.c.l.b16 %v303
    %v900 = vunpack.c.h.b16 %v303
    %v901 = vunpack.c.l.b16 %v304
    %v902 = vunpack.c.h.b16 %v304
    %v903 = vpack.c.b16 %v515, %v511
    %v904 = vpack.c.b16 %v516, %v512
    %v905 = vpack.c.b16 %v517, %v513
    %v906 = vpack.c.b16 %v518, %v514
    %v907 = vpack.c.b16 %v523, %v519
    %v908 = vpack.c.b16 %v524, %v520
    %v909 = vpack.c.b16 %v525, %v521
    %v910 = vpack.c.b16 %v526, %v522
    %v911 = vpack.c.b16 %v531, %v527
    %v912 = vpack.c.b16 %v532, %v528
    %v913 = vpack.c.b16 %v533, %v529
    %v914 = vpack.c.b16 %v534, %v530
    %v915 = vpack.c.b16 %v539, %v535
    %v916 = vpack.c.b16 %v540, %v536
    %v917 = vpack.c.b16 %v541, %v537
    %v918 = vpack.c.b16 %v542, %v538
    %v919 = vpack.c.b16 %v547, %v543
    %v920 = vpack.c.b16 %v548, %v544
    %v921 = vpack.c.b16 %v549, %v545
    %v922 = vpack.c.b16 %v550, %v546
    %v923 = vpack.c.b16 %v555, %v551
    %v924 = vpack.c.b16 %v556, %v552
    %v925 = vpack.c.b16 %v557, %v553
    %v926 = vpack.c.b16 %v558, %v554
    %v927 = vpack.c.b16 %v563, %v559
    %v928 = vpack.c.b16 %v564, %v560
    %v929 = vpack.c.b16 %v565, %v561
    %v930 = vpack.c.b16 %v566, %v562
    %v931 = vpack.c.b16 %v571, %v567
    %v932 = vpack.c.b16 %v572, %v568
    %v933 = vpack.c.b16 %v573, %v569
    %v934 = vpack.c.b16 %v574, %v570
    %v935 = vpack.c.b16 %v579, %v575
    %v936 = vpack.c.b16 %v580, %v576
    %v937 = vpack.c.b16 %v581, %v577
    %v938 = vpack.c.b16 %v582, %v578
    %v939 = vpack.c.b16 %v587, %v583
    %v940 = vpack.c.b16 %v588, %v584
    %v941 = vpack.c.b16 %v589, %v585
    %v942 = vpack.c.b16 %v590, %v586
    %v943 = vpack.c.b16 %v595, %v591
    %v944 = vpack.c.b16 %v596, %v592
    %v945 = vpack.c.b16 %v597, %v593
    %v946 = vpack.c.b16 %v598, %v594
    %v947 = vpack.c.b16 %v603, %v599
    %v948 = vpack.c.b16 %v604, %v600
    %v949 = vpack.c.b16 %v605, %v601
    %v950 = vpack.c.b16 %v606, %v602
    %v951 = vpack.c.b16 %v611, %v607
    %v952 = vpack.c.b16 %v612, %v608
    %v953 = vpack.c.b16 %v613, %v609
    %v954 = vpack.c.b16 %v614, %v610
    %v955 = vpack.c.b16 %v619, %v615
    %v956 = vpack.c.b16 %v620, %v616
    %v957 = vpack.c.b16 %v621, %v617
    %v958 = vpack.c.b16 %v622, %v618
    %v959 = vpack.c.b16 %v627, %v623
    %v960 = vpack.c.b16 %v628, %v624
    %v961 = vpack.c.b16 %v629, %v625
    %v962 = vpack.c.b16 %v630, %v626
    %v963 = vpack.c.b16 %v635, %v631
    %v964 = vpack.c.b16 %v636, %v632
    %v965 = vpack.c.b16 %v637, %v633
    %v966 = vpack.c.b16 %v638, %v634
    %v967 = vpack.c.b16 %v643, %v639
    %v968 = vpack.c.b16 %v644, %v640
    %v969 = vpack.c.b16 %v645, %v641
    %v970 = vpack.c.b16 %v646, %v642
    %v971 = vpack.c.b16 %v651, %v647
    %v972 = vpack.c.b16 %v652, %v648
    %v973 = vpack.c.b16 %v653, %v649
    %v974 = vpack.c.b16 %v654, %v650
    %v975 = vpack.c.b16 %v659, %v655
    %v976 = vpack.c.b16 %v660, %v656
    %v977 = vpack.c.b16 %v661, %v657
    %v978 = vpack.c.b16 %v662, %v658
    %v979 = vpack.c.b16 %v667, %v663
    %v980 = vpack.c.b16 %v668, %v664
    %v981 = vpack.c.b16 %v669, %v665
    %v982 = vpack.c.b16 %v670, %v666
    %v983 = vpack.c.b16 %v675, %v671
    %v984 = vpack.c.b16 %v676, %v672
    %v985 = vpack.c.b16 %v677, %v673
    %v986 = vpack.c.b16 %v678, %v674
    %v987 = vpack.c.b16 %v683, %v679
    %v988 = vpack.c.b16 %v684, %v680
    %v989 = vpack.c.b16 %v685, %v681
    %v990 = vpack.c.b16 %v686, %v682
    %v991 = vpack.c.b16 %v691, %v687
    %v992 = vpack.c.b16 %v692, %v688
    %v993 = vpack.c.b16 %v693, %v689
    %v994 = vpack.c.b16 %v694, %v690
    %v995 = vpack.c.b16 %v699, %v695
    %v996 = vpack.c.b16 %v700, %v696
    %v997 = vpack.c.b16 %v701, %v697
    %v998 = vpack.c.b16 %v702, %v698
    %v999 = vpack.c.b16 %v707, %v703
    %v1000 = vpack.c.b16 %v708, %v704
    %v1001 = vpack.c.b16 %v709, %v705
    %v1002 = vpack.c.b16 %v710, %v706
    %v1003 = vpack.c.b16 %v715, %v711
    %v1004 = vpack.c.b16 %v716, %v712
    %v1005 = vpack.c.b16 %v717, %v713
    %v1006 = vpack.c.b16 %v718, %v714
    %v1007 = vpack.c.b16 %v723, %v719
    %v1008 = vpack.c.b16 %v724, %v720
    %v1009 = vpack.c.b16 %v725, %v721
    %v1010 = vpack.c.b16 %v726, %v722
    %v1011 = vpack.c.b16 %v731, %v727
    %v1012 = vpack.c.b16 %v732, %v728
    %v1013 = vpack.c.b16 %v733, %v729
    %v1014 = vpack.c.b16 %v734, %v730
    %v1015 = vpack.c.b16 %v739, %v735
    %v1016 = vpack.c.b16 %v740, %v736
    %v1017 = vpack.c.b16 %v741, %v737
    %v1018 = vpack.c.b16 %v742, %v738
    %v1019 = vpack.c.b16 %v747, %v743
    %v1020 = vpack.c.b16 %v748, %v744
    %v1021 = vpack.c.b16 %v749, %v745
    %v1022 = vpack.c.b16 %v750, %v746
    %v1023 = vpack.c.b16 %v755, %v751
    %v1024 = vpack.c.b16 %v756, %v752
    %v1025 = vpack.c.b16 %v757, %v753
    %v1026 = vpack.c.b16 %v758, %v754
    %v1027 = vpack.c.b16 %v763, %v759
    %v1028 = vpack.c.b16 %v764, %v760
    %v1029 = vpack.c.b16 %v765, %v761
    %v1030 = vpack.c.b16 %v766, %v762
    %v1031 = vpack.c.b16 %v771, %v767
    %v1032 = vpack.c.b16 %v772, %v768
    %v1033 = vpack.c.b16 %v773, %v769
    %v1034 = vpack.c.b16 %v774, %v770
    %v1035 = vpack.c.b16 %v779, %v775
    %v1036 = vpack.c.b16 %v780, %v776
    %v1037 = vpack.c.b16 %v781, %v777
    %v1038 = vpack.c.b16 %v782, %v778
    %v1039 = vpack.c.b16 %v787, %v783
    %v1040 = vpack.c.b16 %v788, %v784
    %v1041 = vpack.c.b16 %v789, %v785
    %v1042 = vpack.c.b16 %v790, %v786
    %v1043 = vpack.c.b16 %v795, %v791
    %v1044 = vpack.c.b16 %v796, %v792
    %v1045 = vpack.c.b16 %v797, %v793
    %v1046 = vpack.c.b16 %v798, %v794
    %v1047 = vpack.c.b16 %v803, %v799
    %v1048 = vpack.c.b16 %v804, %v800
    %v1049 = vpack.c.b16 %v805, %v801
    %v1050 = vpack.c.b16 %v806, %v802
    %v1051 = vpack.c.b16 %v811, %v807
    %v1052 = vpack.c.b16 %v812, %v808
    %v1053 = vpack.c.b16 %v813, %v809
    %v1054 = vpack.c.b16 %v814, %v810
    %v1055 = vpack.c.b16 %v819, %v815
    %v1056 = vpack.c.b16 %v820, %v816
    %v1057 = vpack.c.b16 %v821, %v817
    %v1058 = vpack.c.b16 %v822, %v818
    %v1059 = vpack.c.b16 %v827, %v823
    %v1060 = vpack.c.b16 %v828, %v824
    %v1061 = vpack.c.b16 %v829, %v825
    %v1062 = vpack.c.b16 %v830, %v826
    %v1063 = vpack.c.b16 %v835, %v831
    %v1064 = vpack.c.b16 %v836, %v832
    %v1065 = vpack.c.b16 %v837, %v833
    %v1066 = vpack.c.b16 %v838, %v834
    %v1067 = vpack.c.b16 %v843, %v839
    %v1068 = vpack.c.b16 %v844, %v840
    %v1069 = vpack.c.b16 %v845, %v841
    %v1070 = vpack.c.b16 %v846, %v842
    %v1071 = vpack.c.b16 %v851, %v847
    %v1072 = vpack.c.b16 %v852, %v848
    %v1073 = vpack.c.b16 %v853, %v849
    %v1074 = vpack.c.b16 %v854, %v850
    %v1075 = vpack.c.b16 %v859, %v855
    %v1076 = vpack.c.b16 %v860, %v856
    %v1077 = vpack.c.b16 %v861, %v857
    %v1078 = vpack.c.b16 %v862, %v858
    %v1079 = vpack.c.b16 %v867, %v863
    %v1080 = vpack.c.b16 %v868, %v864
    %v1081 = vpack.c.b16 %v869, %v865
    %v1082 = vpack.c.b16 %v870, %v866
    %v1083 = vpack.c.b16 %v875, %v871
    %v1084 = vpack.c.b16 %v876, %v872
    %v1085 = vpack.c.b16 %v877, %v873
    %v1086 = vpack.c.b16 %v878, %v874
    %v1087 = vpack.c.b16 %v883, %v879
    %v1088 = vpack.c.b16 %v884, %v880
    %v1089 = vpack.c.b16 %v885, %v881
    %v1090 = vpack.c.b16 %v886, %v882
    %v1091 = vpack.c.b16 %v891, %v887
    %v1092 = vpack.c.b16 %v892, %v888
    %v1093 = vpack.c.b16 %v893, %v889
    %v1094 = vpack.c.b16 %v894, %v890
    %v1095 = vpack.c.b16 %v899, %v895
    %v1096 = vpack.c.b16 %v900, %v896
    %v1097 = vpack.c.b16 %v901, %v897
    %v1098 = vpack.c.b16 %v902, %v898
    %vm1295 = vcmask 130048
    %v1297 = vsel %vm1295, %v108, 0
    %1299 = vmatpush.bf16.msra.mxu0 %v931
    %1300 = vmatpush.bf16.msra.mxu0 %v927
    %1301 = vmatpush.bf16.msra.mxu0 %v923
    %1302 = vmatpush.bf16.msra.mxu0 %v919
    %1303 = vmatpush.bf16.msra.mxu0 %v915
    %1304 = vmatpush.bf16.msra.mxu0 %v911
    %1305 = vmatpush.bf16.msra.mxu0 %v907
    %1306 = vmatpush.bf16.msra.mxu0 %v903
    %1307 = vmatmul.bf16.gmra.mxu0 %v102
    %v1308 = vpop.f32.mrf.mxu0
    %v1309 = vadd.f32 %v307, %v1308
    %v1310 = vpop.f32.mrf.mxu0
    %1311 = vdwg.mxu0
    %1312 = vmatpush.bf16.msra.mxu0 %v963
    %1313 = vmatpush.bf16.msra.mxu0 %v959
    %1314 = vmatpush.bf16.msra.mxu0 %v955
    %1315 = vmatpush.bf16.msra.mxu0 %v951
    %1316 = vmatpush.bf16.msra.mxu0 %v947
    %1317 = vmatpush.bf16.msra.mxu0 %v943
    %1318 = vmatpush.bf16.msra.mxu0 %v939
    %1319 = vmatpush.bf16.msra.mxu0 %v935
    %1320 = vmatmul.bf16.gmra.mxu0 %v103
    %v1321 = vpop.f32.mrf.mxu0
    %v1322 = vadd.f32 %v1309, %v1321
    %v1323 = vpop.f32.mrf.mxu0
    %1324 = vdwg.mxu0
    %1325 = vmatpush.bf16.msra.mxu0 %v995
    %1326 = vmatpush.bf16.msra.mxu0 %v991
    %1327 = vmatpush.bf16.msra.mxu0 %v987
    %1328 = vmatpush.bf16.msra.mxu0 %v983
    %1329 = vmatpush.bf16.msra.mxu0 %v979
    %1330 = vmatpush.bf16.msra.mxu0 %v975
    %1331 = vmatpush.bf16.msra.mxu0 %v971
    %1332 = vmatpush.bf16.msra.mxu0 %v967
    %1333 = vmatmul.bf16.gmra.mxu0 %v104
    %v1334 = vpop.f32.mrf.mxu0
    %v1335 = vadd.f32 %v1322, %v1334
    %v1336 = vpop.f32.mrf.mxu0
    %1337 = vdwg.mxu0
    %1338 = vmatpush.bf16.msra.mxu0 %v1027
    %1339 = vmatpush.bf16.msra.mxu0 %v1023
    %1340 = vmatpush.bf16.msra.mxu0 %v1019
    %1341 = vmatpush.bf16.msra.mxu0 %v1015
    %1342 = vmatpush.bf16.msra.mxu0 %v1011
    %1343 = vmatpush.bf16.msra.mxu0 %v1007
    %1344 = vmatpush.bf16.msra.mxu0 %v1003
    %1345 = vmatpush.bf16.msra.mxu0 %v999
    %1346 = vmatmul.bf16.gmra.mxu0 %v105
    %v1347 = vpop.f32.mrf.mxu0
    %v1348 = vadd.f32 %v1335, %v1347
    %v1349 = vpop.f32.mrf.mxu0
    %1350 = vdwg.mxu0
    %1351 = vmatpush.bf16.msra.mxu0 %v1059
    %1352 = vmatpush.bf16.msra.mxu0 %v1055
    %1353 = vmatpush.bf16.msra.mxu0 %v1051
    %1354 = vmatpush.bf16.msra.mxu0 %v1047
    %1355 = vmatpush.bf16.msra.mxu0 %v1043
    %1356 = vmatpush.bf16.msra.mxu0 %v1039
    %1357 = vmatpush.bf16.msra.mxu0 %v1035
    %1358 = vmatpush.bf16.msra.mxu0 %v1031
    %1359 = vmatmul.bf16.gmra.mxu0 %v106
    %v1360 = vpop.f32.mrf.mxu0
    %v1361 = vadd.f32 %v1348, %v1360
    %v1362 = vpop.f32.mrf.mxu0
    %1363 = vdwg.mxu0
    %1364 = vmatpush.bf16.msra.mxu0 %v1091
    %1365 = vmatpush.bf16.msra.mxu0 %v1087
    %1366 = vmatpush.bf16.msra.mxu0 %v1083
    %1367 = vmatpush.bf16.msra.mxu0 %v1079
    %1368 = vmatpush.bf16.msra.mxu0 %v1075
    %1369 = vmatpush.bf16.msra.mxu0 %v1071
    %1370 = vmatpush.bf16.msra.mxu0 %v1067
    %1371 = vmatpush.bf16.msra.mxu0 %v1063
    %1372 = vmatmul.bf16.gmra.mxu0 %v107
    %v1373 = vpop.f32.mrf.mxu0
    %v1374 = vadd.f32 %v1361, %v1373
    %v1375 = vpop.f32.mrf.mxu0
    %1376 = vdwg.mxu0
    %1377 = vmatpush.bf16.msra.mxu0 0
    %1378 = vmatpush.bf16.msra.mxu0 0
    %1379 = vmatpush.bf16.msra.mxu0 0
    %1380 = vmatpush.bf16.msra.mxu0 0
    %1381 = vmatpush.bf16.msra.mxu0 0
    %1382 = vmatpush.bf16.msra.mxu0 0
    %1383 = vmatpush.bf16.msra.mxu0 0
    %1384 = vmatpush.bf16.msra.mxu0 %v1095
    %1385 = vmatmul.bf16.gmra.mxu0 %v1297
    %v1386 = vpop.f32.mrf.mxu0
    %v1387 = vadd.f32 %v1374, %v1386
    %v1388 = vpop.f32.mrf.mxu0
    %1389 = vdwg.mxu0
    %1390 = vmatpush.bf16.msra.mxu0 %v932
    %1391 = vmatpush.bf16.msra.mxu0 %v928
    %1392 = vmatpush.bf16.msra.mxu0 %v924
    %1393 = vmatpush.bf16.msra.mxu0 %v920
    %1394 = vmatpush.bf16.msra.mxu0 %v916
    %1395 = vmatpush.bf16.msra.mxu0 %v912
    %1396 = vmatpush.bf16.msra.mxu0 %v908
    %1397 = vmatpush.bf16.msra.mxu0 %v904
    %1398 = vmatmul.bf16.gmra.mxu0 %v102
    %v1399 = vpop.f32.mrf.mxu0
    %v1400 = vadd.f32 %v308, %v1399
    %v1401 = vpop.f32.mrf.mxu0
    %1402 = vdwg.mxu0
    %1403 = vmatpush.bf16.msra.mxu0 %v964
    %1404 = vmatpush.bf16.msra.mxu0 %v960
    %1405 = vmatpush.bf16.msra.mxu0 %v956
    %1406 = vmatpush.bf16.msra.mxu0 %v952
    %1407 = vmatpush.bf16.msra.mxu0 %v948
    %1408 = vmatpush.bf16.msra.mxu0 %v944
    %1409 = vmatpush.bf16.msra.mxu0 %v940
    %1410 = vmatpush.bf16.msra.mxu0 %v936
    %1411 = vmatmul.bf16.gmra.mxu0 %v103
    %v1412 = vpop.f32.mrf.mxu0
    %v1413 = vadd.f32 %v1400, %v1412
    %v1414 = vpop.f32.mrf.mxu0
    %1415 = vdwg.mxu0
    %1416 = vmatpush.bf16.msra.mxu0 %v996
    %1417 = vmatpush.bf16.msra.mxu0 %v992
    %1418 = vmatpush.bf16.msra.mxu0 %v988
    %1419 = vmatpush.bf16.msra.mxu0 %v984
    %1420 = vmatpush.bf16.msra.mxu0 %v980
    %1421 = vmatpush.bf16.msra.mxu0 %v976
    %1422 = vmatpush.bf16.msra.mxu0 %v972
    %1423 = vmatpush.bf16.msra.mxu0 %v968
    %1424 = vmatmul.bf16.gmra.mxu0 %v104
    %v1425 = vpop.f32.mrf.mxu0
    %v1426 = vadd.f32 %v1413, %v1425
    %v1427 = vpop.f32.mrf.mxu0
    %1428 = vdwg.mxu0
    %1429 = vmatpush.bf16.msra.mxu0 %v1028
    %1430 = vmatpush.bf16.msra.mxu0 %v1024
    %1431 = vmatpush.bf16.msra.mxu0 %v1020
    %1432 = vmatpush.bf16.msra.mxu0 %v1016
    %1433 = vmatpush.bf16.msra.mxu0 %v1012
    %1434 = vmatpush.bf16.msra.mxu0 %v1008
    %1435 = vmatpush.bf16.msra.mxu0 %v1004
    %1436 = vmatpush.bf16.msra.mxu0 %v1000
    %1437 = vmatmul.bf16.gmra.mxu0 %v105
    %v1438 = vpop.f32.mrf.mxu0
    %v1439 = vadd.f32 %v1426, %v1438
    %v1440 = vpop.f32.mrf.mxu0
    %1441 = vdwg.mxu0
    %1442 = vmatpush.bf16.msra.mxu0 %v1060
    %1443 = vmatpush.bf16.msra.mxu0 %v1056
    %1444 = vmatpush.bf16.msra.mxu0 %v1052
    %1445 = vmatpush.bf16.msra.mxu0 %v1048
    %1446 = vmatpush.bf16.msra.mxu0 %v1044
    %1447 = vmatpush.bf16.msra.mxu0 %v1040
    %1448 = vmatpush.bf16.msra.mxu0 %v1036
    %1449 = vmatpush.bf16.msra.mxu0 %v1032
    %1450 = vmatmul.bf16.gmra.mxu0 %v106
    %v1451 = vpop.f32.mrf.mxu0
    %v1452 = vadd.f32 %v1439, %v1451
    %v1453 = vpop.f32.mrf.mxu0
    %1454 = vdwg.mxu0
    %1455 = vmatpush.bf16.msra.mxu0 %v1092
    %1456 = vmatpush.bf16.msra.mxu0 %v1088
    %1457 = vmatpush.bf16.msra.mxu0 %v1084
    %1458 = vmatpush.bf16.msra.mxu0 %v1080
    %1459 = vmatpush.bf16.msra.mxu0 %v1076
    %1460 = vmatpush.bf16.msra.mxu0 %v1072
    %1461 = vmatpush.bf16.msra.mxu0 %v1068
    %1462 = vmatpush.bf16.msra.mxu0 %v1064
    %1463 = vmatmul.bf16.gmra.mxu0 %v107
    %v1464 = vpop.f32.mrf.mxu0
    %v1465 = vadd.f32 %v1452, %v1464
    %v1466 = vpop.f32.mrf.mxu0
    %1467 = vdwg.mxu0
    %1468 = vmatpush.bf16.msra.mxu0 0
    %1469 = vmatpush.bf16.msra.mxu0 0
    %1470 = vmatpush.bf16.msra.mxu0 0
    %1471 = vmatpush.bf16.msra.mxu0 0
    %1472 = vmatpush.bf16.msra.mxu0 0
    %1473 = vmatpush.bf16.msra.mxu0 0
    %1474 = vmatpush.bf16.msra.mxu0 0
    %1475 = vmatpush.bf16.msra.mxu0 %v1096
    %1476 = vmatmul.bf16.gmra.mxu0 %v1297
    %v1477 = vpop.f32.mrf.mxu0
    %v1478 = vadd.f32 %v1465, %v1477
    %v1479 = vpop.f32.mrf.mxu0
    %1480 = vdwg.mxu0
    %1481 = vmatpush.bf16.msra.mxu0 %v933
    %1482 = vmatpush.bf16.msra.mxu0 %v929
    %1483 = vmatpush.bf16.msra.mxu0 %v925
    %1484 = vmatpush.bf16.msra.mxu0 %v921
    %1485 = vmatpush.bf16.msra.mxu0 %v917
    %1486 = vmatpush.bf16.msra.mxu0 %v913
    %1487 = vmatpush.bf16.msra.mxu0 %v909
    %1488 = vmatpush.bf16.msra.mxu0 %v905
    %1489 = vmatmul.bf16.gmra.mxu0 %v102
    %v1490 = vpop.f32.mrf.mxu0
    %v1491 = vadd.f32 %v309, %v1490
    %v1492 = vpop.f32.mrf.mxu0
    %1493 = vdwg.mxu0
    %1494 = vmatpush.bf16.msra.mxu0 %v965
    %1495 = vmatpush.bf16.msra.mxu0 %v961
    %1496 = vmatpush.bf16.msra.mxu0 %v957
    %1497 = vmatpush.bf16.msra.mxu0 %v953
    %1498 = vmatpush.bf16.msra.mxu0 %v949
    %1499 = vmatpush.bf16.msra.mxu0 %v945
    %1500 = vmatpush.bf16.msra.mxu0 %v941
    %1501 = vmatpush.bf16.msra.mxu0 %v937
    %1502 = vmatmul.bf16.gmra.mxu0 %v103
    %v1503 = vpop.f32.mrf.mxu0
    %v1504 = vadd.f32 %v1491, %v1503
    %v1505 = vpop.f32.mrf.mxu0
    %1506 = vdwg.mxu0
    %1507 = vmatpush.bf16.msra.mxu0 %v997
    %1508 = vmatpush.bf16.msra.mxu0 %v993
    %1509 = vmatpush.bf16.msra.mxu0 %v989
    %1510 = vmatpush.bf16.msra.mxu0 %v985
    %1511 = vmatpush.bf16.msra.mxu0 %v981
    %1512 = vmatpush.bf16.msra.mxu0 %v977
    %1513 = vmatpush.bf16.msra.mxu0 %v973
    %1514 = vmatpush.bf16.msra.mxu0 %v969
    %1515 = vmatmul.bf16.gmra.mxu0 %v104
    %v1516 = vpop.f32.mrf.mxu0
    %v1517 = vadd.f32 %v1504, %v1516
    %v1518 = vpop.f32.mrf.mxu0
    %1519 = vdwg.mxu0
    %1520 = vmatpush.bf16.msra.mxu0 %v1029
    %1521 = vmatpush.bf16.msra.mxu0 %v1025
    %1522 = vmatpush.bf16.msra.mxu0 %v1021
    %1523 = vmatpush.bf16.msra.mxu0 %v1017
    %1524 = vmatpush.bf16.msra.mxu0 %v1013
    %1525 = vmatpush.bf16.msra.mxu0 %v1009
    %1526 = vmatpush.bf16.msra.mxu0 %v1005
    %1527 = vmatpush.bf16.msra.mxu0 %v1001
    %1528 = vmatmul.bf16.gmra.mxu0 %v105
    %v1529 = vpop.f32.mrf.mxu0
    %v1530 = vadd.f32 %v1517, %v1529
    %v1531 = vpop.f32.mrf.mxu0
    %1532 = vdwg.mxu0
    %1533 = vmatpush.bf16.msra.mxu0 %v1061
    %1534 = vmatpush.bf16.msra.mxu0 %v1057
    %1535 = vmatpush.bf16.msra.mxu0 %v1053
    %1536 = vmatpush.bf16.msra.mxu0 %v1049
    %1537 = vmatpush.bf16.msra.mxu0 %v1045
    %1538 = vmatpush.bf16.msra.mxu0 %v1041
    %1539 = vmatpush.bf16.msra.mxu0 %v1037
    %1540 = vmatpush.bf16.msra.mxu0 %v1033
    %1541 = vmatmul.bf16.gmra.mxu0 %v106
    %v1542 = vpop.f32.mrf.mxu0
    %v1543 = vadd.f32 %v1530, %v1542
    %v1544 = vpop.f32.mrf.mxu0
    %1545 = vdwg.mxu0
    %1546 = vmatpush.bf16.msra.mxu0 %v1093
    %1547 = vmatpush.bf16.msra.mxu0 %v1089
    %1548 = vmatpush.bf16.msra.mxu0 %v1085
    %1549 = vmatpush.bf16.msra.mxu0 %v1081
    %1550 = vmatpush.bf16.msra.mxu0 %v1077
    %1551 = vmatpush.bf16.msra.mxu0 %v1073
    %1552 = vmatpush.bf16.msra.mxu0 %v1069
    %1553 = vmatpush.bf16.msra.mxu0 %v1065
    %1554 = vmatmul.bf16.gmra.mxu0 %v107
    %v1555 = vpop.f32.mrf.mxu0
    %v1556 = vadd.f32 %v1543, %v1555
    %v1557 = vpop.f32.mrf.mxu0
    %1558 = vdwg.mxu0
    %1559 = vmatpush.bf16.msra.mxu0 0
    %1560 = vmatpush.bf16.msra.mxu0 0
    %1561 = vmatpush.bf16.msra.mxu0 0
    %1562 = vmatpush.bf16.msra.mxu0 0
    %1563 = vmatpush.bf16.msra.mxu0 0
    %1564 = vmatpush.bf16.msra.mxu0 0
    %1565 = vmatpush.bf16.msra.mxu0 0
    %1566 = vmatpush.bf16.msra.mxu0 %v1097
    %1567 = vmatmul.bf16.gmra.mxu0 %v1297
    %v1568 = vpop.f32.mrf.mxu0
    %v1569 = vadd.f32 %v1556, %v1568
    %v1570 = vpop.f32.mrf.mxu0
    %1571 = vdwg.mxu0
    %1572 = vmatpush.bf16.msra.mxu0 %v934
    %1573 = vmatpush.bf16.msra.mxu0 %v930
    %1574 = vmatpush.bf16.msra.mxu0 %v926
    %1575 = vmatpush.bf16.msra.mxu0 %v922
    %1576 = vmatpush.bf16.msra.mxu0 %v918
    %1577 = vmatpush.bf16.msra.mxu0 %v914
    %1578 = vmatpush.bf16.msra.mxu0 %v910
    %1579 = vmatpush.bf16.msra.mxu0 %v906
    %1580 = vmatmul.bf16.gmra.mxu0 %v102
    %v1581 = vpop.f32.mrf.mxu0
    %v1582 = vadd.f32 %v310, %v1581
    %v1583 = vpop.f32.mrf.mxu0
    %1584 = vdwg.mxu0
    %1585 = vmatpush.bf16.msra.mxu0 %v966
    %1586 = vmatpush.bf16.msra.mxu0 %v962
    %1587 = vmatpush.bf16.msra.mxu0 %v958
    %1588 = vmatpush.bf16.msra.mxu0 %v954
    %1589 = vmatpush.bf16.msra.mxu0 %v950
    %1590 = vmatpush.bf16.msra.mxu0 %v946
    %1591 = vmatpush.bf16.msra.mxu0 %v942
    %1592 = vmatpush.bf16.msra.mxu0 %v938
    %1593 = vmatmul.bf16.gmra.mxu0 %v103
    %v1594 = vpop.f32.mrf.mxu0
    %v1595 = vadd.f32 %v1582, %v1594
    %v1596 = vpop.f32.mrf.mxu0
    %1597 = vdwg.mxu0
    %1598 = vmatpush.bf16.msra.mxu0 %v998
    %1599 = vmatpush.bf16.msra.mxu0 %v994
    %1600 = vmatpush.bf16.msra.mxu0 %v990
    %1601 = vmatpush.bf16.msra.mxu0 %v986
    %1602 = vmatpush.bf16.msra.mxu0 %v982
    %1603 = vmatpush.bf16.msra.mxu0 %v978
    %1604 = vmatpush.bf16.msra.mxu0 %v974
    %1605 = vmatpush.bf16.msra.mxu0 %v970
    %1606 = vmatmul.bf16.gmra.mxu0 %v104
    %v1607 = vpop.f32.mrf.mxu0
    %v1608 = vadd.f32 %v1595, %v1607
    %v1609 = vpop.f32.mrf.mxu0
    %1610 = vdwg.mxu0
    %1611 = vmatpush.bf16.msra.mxu0 %v1030
    %1612 = vmatpush.bf16.msra.mxu0 %v1026
    %1613 = vmatpush.bf16.msra.mxu0 %v1022
    %1614 = vmatpush.bf16.msra.mxu0 %v1018
    %1615 = vmatpush.bf16.msra.mxu0 %v1014
    %1616 = vmatpush.bf16.msra.mxu0 %v1010
    %1617 = vmatpush.bf16.msra.mxu0 %v1006
    %1618 = vmatpush.bf16.msra.mxu0 %v1002
    %1619 = vmatmul.bf16.gmra.mxu0 %v105
    %v1620 = vpop.f32.mrf.mxu0
    %v1621 = vadd.f32 %v1608, %v1620
    %v1622 = vpop.f32.mrf.mxu0
    %1623 = vdwg.mxu0
    %1624 = vmatpush.bf16.msra.mxu0 %v1062
    %1625 = vmatpush.bf16.msra.mxu0 %v1058
    %1626 = vmatpush.bf16.msra.mxu0 %v1054
    %1627 = vmatpush.bf16.msra.mxu0 %v1050
    %1628 = vmatpush.bf16.msra.mxu0 %v1046
    %1629 = vmatpush.bf16.msra.mxu0 %v1042
    %1630 = vmatpush.bf16.msra.mxu0 %v1038
    %1631 = vmatpush.bf16.msra.mxu0 %v1034
    %1632 = vmatmul.bf16.gmra.mxu0 %v106
    %v1633 = vpop.f32.mrf.mxu0
    %v1634 = vadd.f32 %v1621, %v1633
    %v1635 = vpop.f32.mrf.mxu0
    %1636 = vdwg.mxu0
    %1637 = vmatpush.bf16.msra.mxu0 %v1094
    %1638 = vmatpush.bf16.msra.mxu0 %v1090
    %1639 = vmatpush.bf16.msra.mxu0 %v1086
    %1640 = vmatpush.bf16.msra.mxu0 %v1082
    %1641 = vmatpush.bf16.msra.mxu0 %v1078
    %1642 = vmatpush.bf16.msra.mxu0 %v1074
    %1643 = vmatpush.bf16.msra.mxu0 %v1070
    %1644 = vmatpush.bf16.msra.mxu0 %v1066
    %1645 = vmatmul.bf16.gmra.mxu0 %v107
    %v1646 = vpop.f32.mrf.mxu0
    %v1647 = vadd.f32 %v1634, %v1646
    %v1648 = vpop.f32.mrf.mxu0
    %1649 = vdwg.mxu0
    %1650 = vmatpush.bf16.msra.mxu0 0
    %1651 = vmatpush.bf16.msra.mxu0 0
    %1652 = vmatpush.bf16.msra.mxu0 0
    %1653 = vmatpush.bf16.msra.mxu0 0
    %1654 = vmatpush.bf16.msra.mxu0 0
    %1655 = vmatpush.bf16.msra.mxu0 0
    %1656 = vmatpush.bf16.msra.mxu0 0
    %1657 = vmatpush.bf16.msra.mxu0 %v1098
    %1658 = vmatmul.bf16.gmra.mxu0 %v1297
    %v1659 = vpop.f32.mrf.mxu0
    %v1660 = vadd.f32 %v1647, %v1659
    %v1661 = vpop.f32.mrf.mxu0
    %1662 = vdwg.mxu0
    %v1663 = vmax.f32 %v1387, 0.0
    %v1664 = vmax.f32 %v1478, 0.0
    %v1665 = vmax.f32 %v1569, 0.0
    %v1666 = vmax.f32 %v1660, 0.0
    %v1667 = vpack.c.bf16 %v1663, %v1663
    %v1668 = vpack.c.bf16 %v1664, %v1664
    %v1669 = vpack.c.bf16 %v1665, %v1665
    %v1670 = vpack.c.bf16 %v1666, %v1666
    %v1671 = vld [vmem:[#allocation8] sm:$0xf]
    %v1672 = vld [vmem:[#allocation8 + $0x4] sm:$0xf]
    %v1673 = vld [vmem:[#allocation8 + $0x8] sm:$0xf]
    %v1674 = vld [vmem:[#allocation8 + $0xc] sm:$0xf]
    %v1675 = vld [vmem:[#allocation8 + $0x10] sm:$0xf]
    %v1676 = vld [vmem:[#allocation8 + $0x14] sm:$0xf]
    %v1677 = vld [vmem:[#allocation8 + $0x18] sm:$0xf]
    %v1678 = vld [vmem:[#allocation8 + $0x1c] sm:$0xf]
    %v1679 = vld [vmem:[#allocation8 + $0x20] sm:$0xf]
    %v1680 = vld [vmem:[#allocation8 + $0x24] sm:$0xf]
    %v1681 = vld [vmem:[#allocation8 + $0x28] sm:$0xf]
    %v1682 = vld [vmem:[#allocation8 + $0x2c] sm:$0xf]
    %v1683 = vld [vmem:[#allocation8 + $0x30] sm:$0xf]
    %v1684 = vld [vmem:[#allocation8 + $0x34] sm:$0xf]
    %v1685 = vld [vmem:[#allocation8 + $0x38] sm:$0xf]
    %v1686 = vld [vmem:[#allocation8 + $0x3c] sm:$0xf]
    %v1687 = vld [vmem:[#allocation8 + $0x40] sm:$0xf]
    %v1688 = vld [vmem:[#allocation8 + $0x44] sm:$0xf]
    %v1689 = vld [vmem:[#allocation8 + $0x48] sm:$0xf]
    %v1690 = vld [vmem:[#allocation8 + $0x4c] sm:$0xf]
    %v1691 = vld [vmem:[#allocation8 + $0x50] sm:$0xf]
    %v1692 = vld [vmem:[#allocation8 + $0x54] sm:$0xf]
    %v1693 = vld [vmem:[#allocation8 + $0x58] sm:$0xf]
    %v1694 = vld [vmem:[#allocation8 + $0x5c] sm:$0xf]
    %v1695 = vld [vmem:[#allocation8 + $0x60] sm:$0xf]
    %v1696 = vld [vmem:[#allocation8 + $0x64] sm:$0xf]
    %v1697 = vld [vmem:[#allocation8 + $0x68] sm:$0xf]
    %v1698 = vld [vmem:[#allocation8 + $0x6c] sm:$0xf]
    %v1699 = vld [vmem:[#allocation8 + $0x70] sm:$0xf]
    %v1700 = vld [vmem:[#allocation8 + $0x74] sm:$0xf]
    %v1701 = vld [vmem:[#allocation8 + $0x78] sm:$0xf]
    %v1702 = vld [vmem:[#allocation8 + $0x7c] sm:$0xf]
    %v1703 = vld [vmem:[#allocation8 + $0x80] sm:$0xf]
    %v1704 = vld [vmem:[#allocation8 + $0x84] sm:$0xf]
    %v1705 = vld [vmem:[#allocation8 + $0x88] sm:$0xf]
    %v1706 = vld [vmem:[#allocation8 + $0x8c] sm:$0xf]
    %v1707 = vld [vmem:[#allocation8 + $0x90] sm:$0xf]
    %v1708 = vld [vmem:[#allocation8 + $0x94] sm:$0xf]
    %v1709 = vld [vmem:[#allocation8 + $0x98] sm:$0xf]
    %v1710 = vld [vmem:[#allocation8 + $0x9c] sm:$0xf]
    %v1711 = vld [vmem:[#allocation8 + $0xa0] sm:$0xf]
    %v1712 = vld [vmem:[#allocation8 + $0xa4] sm:$0xf]
    %v1713 = vld [vmem:[#allocation8 + $0xa8] sm:$0xf]
    %v1714 = vld [vmem:[#allocation8 + $0xac] sm:$0xf]
    %v1715 = vld [vmem:[#allocation8 + $0xb0] sm:$0xf]
    %v1716 = vld [vmem:[#allocation8 + $0xb4] sm:$0xf]
    %v1717 = vld [vmem:[#allocation8 + $0xb8] sm:$0xf]
    %v1718 = vld [vmem:[#allocation8 + $0xbc] sm:$0xf]
    %v1719 = vld [vmem:[#allocation8 + $0xc0] sm:$0xf]
    %v1720 = vld [vmem:[#allocation8 + $0xc4] sm:$0xf]
    %v1721 = vld [vmem:[#allocation8 + $0xc8] sm:$0xf]
    %v1722 = vld [vmem:[#allocation8 + $0xcc] sm:$0xf]
    %v1723 = vld [vmem:[#allocation8 + $0xd0] sm:$0xf]
    %v1724 = vld [vmem:[#allocation8 + $0xd4] sm:$0xf]
    %v1725 = vld [vmem:[#allocation8 + $0xd8] sm:$0xf]
    %v1726 = vld [vmem:[#allocation8 + $0xdc] sm:$0xf]
    %v1727 = vld [vmem:[#allocation8 + $0xe0] sm:$0xf]
    %v1728 = vld [vmem:[#allocation8 + $0xe4] sm:$0xf]
    %v1729 = vld [vmem:[#allocation8 + $0xe8] sm:$0xf]
    %v1730 = vld [vmem:[#allocation8 + $0xec] sm:$0xf]
    %v1731 = vld [vmem:[#allocation8 + $0xf0] sm:$0xf]
    %v1732 = vld [vmem:[#allocation8 + $0xf4] sm:$0xf]
    %v1733 = vld [vmem:[#allocation8 + $0xf8] sm:$0xf]
    %v1734 = vld [vmem:[#allocation8 + $0xfc] sm:$0xf]
    %v1735 = vld [vmem:[%s4] sm:$0x1]
    %v1737 = vperm.slane %v1735, 0
    %v1803 = vunpack.c.l.b16 %v1671
    %v1804 = vunpack.c.l.b16 %v1672
    %v1805 = vunpack.c.l.b16 %v1673
    %v1806 = vunpack.c.l.b16 %v1674
    %v1807 = vunpack.c.l.b16 %v1675
    %v1808 = vunpack.c.l.b16 %v1676
    %v1809 = vunpack.c.l.b16 %v1677
    %v1810 = vunpack.c.l.b16 %v1678
    %v1811 = vunpack.c.l.b16 %v1679
    %v1812 = vunpack.c.l.b16 %v1680
    %v1813 = vunpack.c.l.b16 %v1681
    %v1814 = vunpack.c.l.b16 %v1682
    %v1815 = vunpack.c.l.b16 %v1683
    %v1816 = vunpack.c.l.b16 %v1684
    %v1817 = vunpack.c.l.b16 %v1685
    %v1818 = vunpack.c.l.b16 %v1686
    %v1819 = vunpack.c.l.b16 %v1687
    %v1820 = vunpack.c.l.b16 %v1688
    %v1821 = vunpack.c.l.b16 %v1689
    %v1822 = vunpack.c.l.b16 %v1690
    %v1823 = vunpack.c.l.b16 %v1691
    %v1824 = vunpack.c.l.b16 %v1692
    %v1825 = vunpack.c.l.b16 %v1693
    %v1826 = vunpack.c.l.b16 %v1694
    %v1827 = vunpack.c.l.b16 %v1695
    %v1828 = vunpack.c.l.b16 %v1696
    %v1829 = vunpack.c.l.b16 %v1697
    %v1830 = vunpack.c.l.b16 %v1698
    %v1831 = vunpack.c.l.b16 %v1699
    %v1832 = vunpack.c.l.b16 %v1700
    %v1833 = vunpack.c.l.b16 %v1701
    %v1834 = vunpack.c.l.b16 %v1702
    %v1835 = vunpack.c.l.b16 %v1703
    %v1836 = vunpack.c.l.b16 %v1704
    %v1837 = vunpack.c.l.b16 %v1705
    %v1838 = vunpack.c.l.b16 %v1706
    %v1839 = vunpack.c.l.b16 %v1707
    %v1840 = vunpack.c.l.b16 %v1708
    %v1841 = vunpack.c.l.b16 %v1709
    %v1842 = vunpack.c.l.b16 %v1710
    %v1843 = vunpack.c.l.b16 %v1711
    %v1844 = vunpack.c.l.b16 %v1712
    %v1845 = vunpack.c.l.b16 %v1713
    %v1846 = vunpack.c.l.b16 %v1714
    %v1847 = vunpack.c.l.b16 %v1715
    %v1848 = vunpack.c.l.b16 %v1716
    %v1849 = vunpack.c.l.b16 %v1717
    %v1850 = vunpack.c.l.b16 %v1718
    %v1851 = vunpack.c.l.b16 %v1719
    %v1852 = vunpack.c.l.b16 %v1720
    %v1853 = vunpack.c.l.b16 %v1721
    %v1854 = vunpack.c.l.b16 %v1722
    %v1855 = vunpack.c.l.b16 %v1723
    %v1856 = vunpack.c.l.b16 %v1724
    %v1857 = vunpack.c.l.b16 %v1725
    %v1858 = vunpack.c.l.b16 %v1726
    %v1859 = vunpack.c.l.b16 %v1727
    %v1860 = vunpack.c.l.b16 %v1728
    %v1861 = vunpack.c.l.b16 %v1729
    %v1862 = vunpack.c.l.b16 %v1730
    %v1863 = vunpack.c.l.b16 %v1731
    %v1864 = vunpack.c.l.b16 %v1732
    %v1865 = vunpack.c.l.b16 %v1733
    %v1866 = vunpack.c.l.b16 %v1734
    %v1867 = vpack.c.b16 %v1804, %v1803
    %v1868 = vpack.c.b16 %v1806, %v1805
    %v1869 = vpack.c.b16 %v1808, %v1807
    %v1870 = vpack.c.b16 %v1810, %v1809
    %v1871 = vpack.c.b16 %v1812, %v1811
    %v1872 = vpack.c.b16 %v1814, %v1813
    %v1873 = vpack.c.b16 %v1816, %v1815
    %v1874 = vpack.c.b16 %v1818, %v1817
    %v1875 = vpack.c.b16 %v1820, %v1819
    %v1876 = vpack.c.b16 %v1822, %v1821
    %v1877 = vpack.c.b16 %v1824, %v1823
    %v1878 = vpack.c.b16 %v1826, %v1825
    %v1879 = vpack.c.b16 %v1828, %v1827
    %v1880 = vpack.c.b16 %v1830, %v1829
    %v1881 = vpack.c.b16 %v1832, %v1831
    %v1882 = vpack.c.b16 %v1834, %v1833
    %v1883 = vpack.c.b16 %v1836, %v1835
    %v1884 = vpack.c.b16 %v1838, %v1837
    %v1885 = vpack.c.b16 %v1840, %v1839
    %v1886 = vpack.c.b16 %v1842, %v1841
    %v1887 = vpack.c.b16 %v1844, %v1843
    %v1888 = vpack.c.b16 %v1846, %v1845
    %v1889 = vpack.c.b16 %v1848, %v1847
    %v1890 = vpack.c.b16 %v1850, %v1849
    %v1891 = vpack.c.b16 %v1852, %v1851
    %v1892 = vpack.c.b16 %v1854, %v1853
    %v1893 = vpack.c.b16 %v1856, %v1855
    %v1894 = vpack.c.b16 %v1858, %v1857
    %v1895 = vpack.c.b16 %v1860, %v1859
    %v1896 = vpack.c.b16 %v1862, %v1861
    %v1897 = vpack.c.b16 %v1864, %v1863
    %v1898 = vpack.c.b16 %v1866, %v1865
    %1931 = vmatpush.bf16.msra.mxu0 %v1874
    %1932 = vmatpush.bf16.msra.mxu0 %v1873
    %1933 = vmatpush.bf16.msra.mxu0 %v1872
    %1934 = vmatpush.bf16.msra.mxu0 %v1871
    %1935 = vmatpush.bf16.msra.mxu0 %v1870
    %1936 = vmatpush.bf16.msra.mxu0 %v1869
    %1937 = vmatpush.bf16.msra.mxu0 %v1868
    %1938 = vmatpush.bf16.msra.mxu0 %v1867
    %1939 = vmatmul.bf16.gmra.mxu0 %v1667
    %v1940 = vpop.f32.mrf.mxu0
    %v1941 = vadd.f32 %v1737, %v1940
    %v1942 = vpop.f32.mrf.mxu0
    %1943 = vdwg.mxu0
    %1944 = vmatpush.bf16.msra.mxu0 %v1882
    %1945 = vmatpush.bf16.msra.mxu0 %v1881
    %1946 = vmatpush.bf16.msra.mxu0 %v1880
    %1947 = vmatpush.bf16.msra.mxu0 %v1879
    %1948 = vmatpush.bf16.msra.mxu0 %v1878
    %1949 = vmatpush.bf16.msra.mxu0 %v1877
    %1950 = vmatpush.bf16.msra.mxu0 %v1876
    %1951 = vmatpush.bf16.msra.mxu0 %v1875
    %1952 = vmatmul.bf16.gmra.mxu0 %v1668
    %v1953 = vpop.f32.mrf.mxu0
    %v1954 = vadd.f32 %v1941, %v1953
    %v1955 = vpop.f32.mrf.mxu0
    %1956 = vdwg.mxu0
    %1957 = vmatpush.bf16.msra.mxu0 %v1890
    %1958 = vmatpush.bf16.msra.mxu0 %v1889
    %1959 = vmatpush.bf16.msra.mxu0 %v1888
    %1960 = vmatpush.bf16.msra.mxu0 %v1887
    %1961 = vmatpush.bf16.msra.mxu0 %v1886
    %1962 = vmatpush.bf16.msra.mxu0 %v1885
    %1963 = vmatpush.bf16.msra.mxu0 %v1884
    %1964 = vmatpush.bf16.msra.mxu0 %v1883
    %1965 = vmatmul.bf16.gmra.mxu0 %v1669
    %v1966 = vpop.f32.mrf.mxu0
    %v1967 = vadd.f32 %v1954, %v1966
    %v1968 = vpop.f32.mrf.mxu0
    %1969 = vdwg.mxu0
    %1970 = vmatpush.bf16.msra.mxu0 %v1898
    %1971 = vmatpush.bf16.msra.mxu0 %v1897
    %1972 = vmatpush.bf16.msra.mxu0 %v1896
    %1973 = vmatpush.bf16.msra.mxu0 %v1895
    %1974 = vmatpush.bf16.msra.mxu0 %v1894
    %1975 = vmatpush.bf16.msra.mxu0 %v1893
    %1976 = vmatpush.bf16.msra.mxu0 %v1892
    %1977 = vmatpush.bf16.msra.mxu0 %v1891
    %1978 = vmatmul.bf16.gmra.mxu0 %v1670
    %v1979 = vpop.f32.mrf.mxu0
    %v1980 = vadd.f32 %v1967, %v1979
    %v1981 = vpop.f32.mrf.mxu0
    %1982 = vdwg.mxu0
    %1983 = vst [vmem:[#allocation10] sm:$0x3] %v1980
    // Predicated region
    $region38: #{tpu_custom_call.1} parent=1 // pred_check
      _
    $region39: #{tpu_custom_call.1} parent=1 // pred_check_branch
      %1985 = sbr.rel (0) target = $region41
    $region40: #{tpu_custom_call.1} parent=1 // pred_region
      %1987 = vsyncadd [#allocation4], 0
      %s1989 = sshll.u32 [#allocation10], 4
      %s1990 = int_to_ptr.vmem [resolvable:$true] %s1989
      %s1991 = sshll.u32 %s5, 4
      %s1992 = int_to_ptr.hbm [resolvable:$true] %s1991
      %1994 = dma.vmem_to_hbm [thread:$0]  %s1990, 32, %s1992, [#allocation4]
    $region41: #{tpu_custom_call.1} parent=1 // pred_fallthru
      _
    // Predicated region
    $region42: #{tpu_custom_call.1} parent=1 // pred_check
      _
    $region43: #{tpu_custom_call.1} parent=1 // pred_check_branch
      %1996 = sbr.rel (0) target = $region45
    $region44: #{tpu_custom_call.1} parent=1 // pred_region
      %1998 = dma.done [#allocation4], 32
    $region45: #{tpu_custom_call.1} parent=1 // pred_fallthru
      _
    %1999 = vsyncpa [#allocation3], 1
    %2000 = vsyncpa [#allocation6], 1
    %2001 = vsyncpa [#allocation9], 1
    %2002 = vsyncpa [#allocation4], 1

</llo_original>
